<compile_context>
chip_gen: v6e
topology: v6e:2x2x1
jax: 0.10.0
libtpu: 0.0.40
codegen_flags: <defaults>
</compile_context>

<pallas_src>
import jax
import jax.numpy as jnp
from jax.experimental import pallas as pl
from jax.experimental.pallas import tpu as pltpu

# ----------------------------- model sizes ---------------------------------
# The reference script has `all_categories = []`; a zero-width category tensor
# is degenerate, so we pick a small non-zero n_categories for this synthetic
# kernel (shapes stay consistent with the module's constructor).
N_CATEGORIES = 4
INPUT_SIZE = 16
HIDDEN_SIZE = 32
OUTPUT_SIZE = 16
BATCH = 2
SEQ_LEN = 8

# ----------------------------- padded layout --------------------------------
B_PAD = 8                         # sublane-dense batch
K_CI = N_CATEGORIES + INPUT_SIZE  # 20  (category+input rows of the weights)
K_CI_PAD = 128                    # padded contraction dim for the x part
NH_PAD = 128                      # lane-dense hidden width
NO_PAD = 128                      # lane-dense output width
N1 = NH_PAD + NO_PAD              # 256: fused [hidden | output] width
NEG = -1e30                       # softmax mask value for padded lanes


def rnn_fused_kernel(x_ref, h0_ref, w1ci_ref, b1_ref, whh_ref, who_ref,
                     w2h_ref, w2o_ref, b2_ref, logp_ref, h_ref):
    """Whole T-step recurrence in one kernel invocation (no grid)."""
    T = SEQ_LEN

    # ---- Phase 0: batched non-recurrent x-path matmul, all T steps at once.
    # zx = [i2h_x_part | i2o_x_part] with M = T*B_PAD = 64 rows.
    zx = (jnp.dot(x_ref[...], w1ci_ref[...], preferred_element_type=jnp.float32)
          + b1_ref[...])                               # (T*B_PAD, N1)
    zx_h = zx[:, :NH_PAD]                              # lane-boundary slice
    zx_o = zx[:, NH_PAD:]

    # ---- Phase 1: minimal serial hidden recurrence.
    # h_t = zx_h[t] + h_{t-1} @ W_hh : one (8,128)@(128,128) matmul per step.
    # Statically unrolled Python loop (T is tiny); every h_t stays live in
    # vregs so the batched output pass below never touches HBM.
    whh = whh_ref[...]
    h = h0_ref[...]                                    # (B_PAD, NH_PAD)
    hs_prev, hs = [], []
    for t in range(T):
        hs_prev.append(h)
        h = (zx_h[t * B_PAD:(t + 1) * B_PAD, :]        # static, tile-aligned
             + jnp.dot(h, whh, preferred_element_type=jnp.float32))
        hs.append(h)
    h_ref[...] = h                                     # final hidden state

    H = jnp.concatenate(hs, axis=0)                    # (T*B_PAD, NH_PAD)
    H_prev = jnp.concatenate(hs_prev, axis=0)          # (T*B_PAD, NH_PAD)

    # ---- Phase 2: batched output path (M = T*B_PAD = 64 rows).
    # i2o(x_t) = zx_o[t] + h_{t-1} @ W_ho   (hidden part of the i2o matmul)
    i2o = zx_o + jnp.dot(H_prev, who_ref[...], preferred_element_type=jnp.float32)
    # o2o(cat([h_t, i2o_t])) = h_t @ W2_h + i2o_t @ W2_o + b2 — the concat
    # never materializes.  Dropout(p=0.1) is identity in eval mode.
    # TODO(synk): training-mode dropout mask (pltpu.prng_*) intentionally omitted.
    out2 = (jnp.dot(H, w2h_ref[...], preferred_element_type=jnp.float32)
            + jnp.dot(i2o, w2o_ref[...], preferred_element_type=jnp.float32)
            + b2_ref[...])                             # (T*B_PAD, NO_PAD)
    # b2 holds -1e30 on padded lanes -> exp() underflows to 0 in the sum below.

    # LogSoftmax over the feature axis (one clean 128-lane vreg per row).
    m = jnp.max(out2, axis=1, keepdims=True)
    shifted = out2 - m
    lse = jnp.log(jnp.sum(jnp.exp(shifted), axis=1, keepdims=True))
    logp_ref[...] = shifted - lse                      # lane-dense full store


def prepare_params(params):
    """One-time weight prep: transpose, fuse, split, pad to TPU tiles."""
    w_i2h, b_i2h, w_i2o, b_i2o, w_o2o, b_o2o = params
    nh, no = HIDDEN_SIZE, OUTPUT_SIZE

    # First layer (i2h + i2o fused along the output axis) in (in, out) layout:
    # columns [0:nh) -> i2h, columns [NH_PAD:NH_PAD+no) -> i2o.
    # Only the non-recurrent (category+input) rows live here; the recurrent
    # (hidden) rows are split off below so the x-path can leave the loop.
    w1_ci = jnp.zeros((K_CI_PAD, N1), jnp.float32)
    w1_ci = w1_ci.at[:K_CI, :nh].set(w_i2h.T[:K_CI, :])
    w1_ci = w1_ci.at[:K_CI, NH_PAD:NH_PAD + no].set(w_i2o.T[:K_CI, :])

    b1 = jnp.zeros((1, N1), jnp.float32)
    b1 = b1.at[0, :nh].set(b_i2h)
    b1 = b1.at[0, NH_PAD:NH_PAD + no].set(b_i2o)

    # Recurrent weights split by destination: hidden->hidden and hidden->i2o.
    w_hh = jnp.zeros((NH_PAD, NH_PAD), jnp.float32).at[:nh, :nh].set(w_i2h.T[K_CI:, :])
    w_ho = jnp.zeros((NH_PAD, NO_PAD), jnp.float32).at[:nh, :no].set(w_i2o.T[K_CI:, :])

    # o2o split by source half of the concat: hidden half and i2o-output half.
    w2_h = jnp.zeros((NH_PAD, NO_PAD), jnp.float32).at[:nh, :no].set(w_o2o.T[:nh, :])
    w2_o = jnp.zeros((NO_PAD, NO_PAD), jnp.float32).at[:no, :no].set(w_o2o.T[nh:, :])

    # o2o bias with the log-softmax lane mask baked in: padded lanes -> -1e30.
    b2 = jnp.full((1, NO_PAD), NEG, jnp.float32).at[0, :no].set(b_o2o)

    return (w1_ci, b1, w_hh, w_ho, w2_h, w2_o, b2)


@jax.jit
def rnn_forward_seq(category, inputs_seq, h0, prep):
    """Run the whole T-step recurrence in one pallas_call.

    category:   (B, nc)        — constant over time
    inputs_seq: (T, B, ni)     — per-step inputs
    h0:         (B, nh)        — initial hidden
    Returns (logp_seq (T, B, no), hidden_final (B, nh)).
    """
    w1_ci, b1, w_hh, w_ho, w2_h, w2_o, b2 = prep
    T, B, _ = inputs_seq.shape

    # Per-step [category | input] slab, padded once and flattened to
    # (T*B_PAD, K_CI_PAD) so every kernel operand is a plain 2-D tile.
    x_ci = jnp.zeros((T, B_PAD, K_CI_PAD), jnp.float32)
    x_ci = x_ci.at[:, :B, :N_CATEGORIES].set(
        jnp.broadcast_to(category[None], (T, B, N_CATEGORIES)))
    x_ci = x_ci.at[:, :B, N_CATEGORIES:N_CATEGORIES + INPUT_SIZE].set(inputs_seq)
    x_flat = x_ci.reshape(T * B_PAD, K_CI_PAD)

    h0_pad = jnp.zeros((B_PAD, NH_PAD), jnp.float32).at[:B, :HIDDEN_SIZE].set(h0)

    vmem = pl.BlockSpec(memory_space=pltpu.MemorySpace.VMEM)
    logp_flat, h_pad = pl.pallas_call(
        rnn_fused_kernel,
        out_shape=(
            jax.ShapeDtypeStruct((T * B_PAD, NO_PAD), jnp.float32),
            jax.ShapeDtypeStruct((B_PAD, NH_PAD), jnp.float32),
        ),
        in_specs=[vmem] * 9,          # whole arrays resident in VMEM, no grid
        out_specs=(vmem, vmem),
    )(x_flat, h0_pad, w1_ci, b1, w_hh, w_ho, w2_h, w2_o, b2)

    logp = logp_flat.reshape(T, B_PAD, NO_PAD)[:, :B, :OUTPUT_SIZE]
    return logp, h_pad[:B, :HIDDEN_SIZE]


def init_params(key):
    """Deterministic init mimicking nn.Linear (uniform +/- 1/sqrt(fan_in))."""
    def linear(key, in_f, out_f):
        k1, k2 = jax.random.split(key)
        bound = 1.0 / jnp.sqrt(in_f)
        w = jax.random.uniform(k1, (out_f, in_f), jnp.float32, -bound, bound)
        b = jax.random.uniform(k2, (out_f,), jnp.float32, -bound, bound)
        return w, b

    k1, k2, k3 = jax.random.split(key, 3)
    comb = N_CATEGORIES + INPUT_SIZE + HIDDEN_SIZE
    w_i2h, b_i2h = linear(k1, comb, HIDDEN_SIZE)
    w_i2o, b_i2o = linear(k2, comb, OUTPUT_SIZE)
    w_o2o, b_o2o = linear(k3, HIDDEN_SIZE + OUTPUT_SIZE, OUTPUT_SIZE)
    return (w_i2h, b_i2h, w_i2o, b_i2o, w_o2o, b_o2o)


def rnn_forward_ref(category, inputs_seq, hidden, params):
    """Pure-JAX per-step reference of the PyTorch forward (eval mode)."""
    w_i2h, b_i2h, w_i2o, b_i2o, w_o2o, b_o2o = params
    logps = []
    for t in range(inputs_seq.shape[0]):
        x = jnp.concatenate([category, inputs_seq[t], hidden], axis=1)
        h = x @ w_i2h.T + b_i2h
        o = x @ w_i2o.T + b_i2o
        o2 = jnp.concatenate([h, o], axis=1) @ w_o2o.T + b_o2o
        logps.append(jax.nn.log_softmax(o2, axis=1))
        hidden = h
    return jnp.stack(logps), hidden


if __name__ == "__main__":
    key = jax.random.PRNGKey(0)
    k_par, k_cat, k_in, k_hid = jax.random.split(key, 4)

    params = init_params(k_par)
    prep = prepare_params(params)                     # one-time weight prep

    category = jax.random.normal(k_cat, (BATCH, N_CATEGORIES), jnp.float32)
    inputs_seq = jax.random.normal(k_in, (SEQ_LEN, BATCH, INPUT_SIZE), jnp.float32)
    hidden0 = jax.random.normal(k_hid, (BATCH, HIDDEN_SIZE), jnp.float32)

    logp, hidden_final = jax.block_until_ready(
        rnn_forward_seq(category, inputs_seq, hidden0, prep))

    logp_ref, hidden_ref = rnn_forward_ref(category, inputs_seq, hidden0, params)
    assert logp.shape == (SEQ_LEN, BATCH, OUTPUT_SIZE)
    assert hidden_final.shape == (BATCH, HIDDEN_SIZE)
    assert jnp.allclose(logp, logp_ref, atol=2e-3, rtol=2e-3)
    assert jnp.allclose(hidden_final, hidden_ref, atol=2e-3, rtol=2e-3)

    print("KERNEL_OK")
</pallas_src>

<mosaic_0001>
module attributes {stable_mosaic.version = 11 : i64} {
  func.func @rnn_fused_kernel(%arg0: memref<64x128xf32, #tpu.memory_space<vmem>>, %arg1: memref<8x128xf32, #tpu.memory_space<vmem>>, %arg2: memref<128x256xf32, #tpu.memory_space<vmem>>, %arg3: memref<1x256xf32, #tpu.memory_space<vmem>>, %arg4: memref<128x128xf32, #tpu.memory_space<vmem>>, %arg5: memref<128x128xf32, #tpu.memory_space<vmem>>, %arg6: memref<128x128xf32, #tpu.memory_space<vmem>>, %arg7: memref<128x128xf32, #tpu.memory_space<vmem>>, %arg8: memref<1x128xf32, #tpu.memory_space<vmem>>, %arg9: memref<64x128xf32, #tpu.memory_space<vmem>>, %arg10: memref<8x128xf32, #tpu.memory_space<vmem>>) attributes {dimension_semantics = [], scalar_prefetch = 0 : i64, scratch_operands = 0 : i64, tpu.core_type = #tpu.core_type<tc>} {
    %c0 = arith.constant 0 : index
    %c0_0 = arith.constant 0 : index
    %0 = vector.load %arg0[%c0, %c0_0] : memref<64x128xf32, #tpu.memory_space<vmem>>, vector<64x128xf32>
    %c0_1 = arith.constant 0 : index
    %c0_2 = arith.constant 0 : index
    %1 = vector.load %arg2[%c0_1, %c0_2] : memref<128x256xf32, #tpu.memory_space<vmem>>, vector<128x256xf32>
    %cst = arith.constant dense<0.000000e+00> : vector<64x256xf32>
    %2 = tpu.matmul %0, %1, %cst {dimension_numbers = #tpu.dot_dimension_numbers<[1], [0], [0], [1], [0, 0, 1, 1], [], []>} : vector<64x128xf32>, vector<128x256xf32>, vector<64x256xf32> -> vector<64x256xf32>
    %c0_3 = arith.constant 0 : index
    %c0_4 = arith.constant 0 : index
    %3 = vector.load %arg3[%c0_3, %c0_4] : memref<1x256xf32, #tpu.memory_space<vmem>>, vector<1x256xf32>
    %4 = vector.broadcast %3 : vector<1x256xf32> to vector<64x256xf32>
    %5 = arith.addf %2, %4 : vector<64x256xf32>
    %6 = vector.extract_strided_slice %5 {offsets = [0, 0], sizes = [64, 128], strides = [1, 1]} : vector<64x256xf32> to vector<64x128xf32>
    %7 = vector.extract_strided_slice %5 {offsets = [0, 128], sizes = [64, 128], strides = [1, 1]} : vector<64x256xf32> to vector<64x128xf32>
    %c0_5 = arith.constant 0 : index
    %c0_6 = arith.constant 0 : index
    %8 = vector.load %arg4[%c0_5, %c0_6] : memref<128x128xf32, #tpu.memory_space<vmem>>, vector<128x128xf32>
    %c0_7 = arith.constant 0 : index
    %c0_8 = arith.constant 0 : index
    %9 = vector.load %arg1[%c0_7, %c0_8] : memref<8x128xf32, #tpu.memory_space<vmem>>, vector<8x128xf32>
    %10 = vector.extract_strided_slice %6 {offsets = [0, 0], sizes = [8, 128], strides = [1, 1]} : vector<64x128xf32> to vector<8x128xf32>
    %cst_9 = arith.constant dense<0.000000e+00> : vector<8x128xf32>
    %11 = tpu.matmul %9, %8, %cst_9 {dimension_numbers = #tpu.dot_dimension_numbers<[1], [0], [0], [1], [0, 0, 1, 1], [], []>} : vector<8x128xf32>, vector<128x128xf32>, vector<8x128xf32> -> vector<8x128xf32>
    %12 = arith.addf %10, %11 : vector<8x128xf32>
    %13 = vector.extract_strided_slice %6 {offsets = [8, 0], sizes = [8, 128], strides = [1, 1]} : vector<64x128xf32> to vector<8x128xf32>
    %cst_10 = arith.constant dense<0.000000e+00> : vector<8x128xf32>
    %14 = tpu.matmul %12, %8, %cst_10 {dimension_numbers = #tpu.dot_dimension_numbers<[1], [0], [0], [1], [0, 0, 1, 1], [], []>} : vector<8x128xf32>, vector<128x128xf32>, vector<8x128xf32> -> vector<8x128xf32>
    %15 = arith.addf %13, %14 : vector<8x128xf32>
    %16 = vector.extract_strided_slice %6 {offsets = [16, 0], sizes = [8, 128], strides = [1, 1]} : vector<64x128xf32> to vector<8x128xf32>
    %cst_11 = arith.constant dense<0.000000e+00> : vector<8x128xf32>
    %17 = tpu.matmul %15, %8, %cst_11 {dimension_numbers = #tpu.dot_dimension_numbers<[1], [0], [0], [1], [0, 0, 1, 1], [], []>} : vector<8x128xf32>, vector<128x128xf32>, vector<8x128xf32> -> vector<8x128xf32>
    %18 = arith.addf %16, %17 : vector<8x128xf32>
    %19 = vector.extract_strided_slice %6 {offsets = [24, 0], sizes = [8, 128], strides = [1, 1]} : vector<64x128xf32> to vector<8x128xf32>
    %cst_12 = arith.constant dense<0.000000e+00> : vector<8x128xf32>
    %20 = tpu.matmul %18, %8, %cst_12 {dimension_numbers = #tpu.dot_dimension_numbers<[1], [0], [0], [1], [0, 0, 1, 1], [], []>} : vector<8x128xf32>, vector<128x128xf32>, vector<8x128xf32> -> vector<8x128xf32>
    %21 = arith.addf %19, %20 : vector<8x128xf32>
    %22 = vector.extract_strided_slice %6 {offsets = [32, 0], sizes = [8, 128], strides = [1, 1]} : vector<64x128xf32> to vector<8x128xf32>
    %cst_13 = arith.constant dense<0.000000e+00> : vector<8x128xf32>
    %23 = tpu.matmul %21, %8, %cst_13 {dimension_numbers = #tpu.dot_dimension_numbers<[1], [0], [0], [1], [0, 0, 1, 1], [], []>} : vector<8x128xf32>, vector<128x128xf32>, vector<8x128xf32> -> vector<8x128xf32>
    %24 = arith.addf %22, %23 : vector<8x128xf32>
    %25 = vector.extract_strided_slice %6 {offsets = [40, 0], sizes = [8, 128], strides = [1, 1]} : vector<64x128xf32> to vector<8x128xf32>
    %cst_14 = arith.constant dense<0.000000e+00> : vector<8x128xf32>
    %26 = tpu.matmul %24, %8, %cst_14 {dimension_numbers = #tpu.dot_dimension_numbers<[1], [0], [0], [1], [0, 0, 1, 1], [], []>} : vector<8x128xf32>, vector<128x128xf32>, vector<8x128xf32> -> vector<8x128xf32>
    %27 = arith.addf %25, %26 : vector<8x128xf32>
    %28 = vector.extract_strided_slice %6 {offsets = [48, 0], sizes = [8, 128], strides = [1, 1]} : vector<64x128xf32> to vector<8x128xf32>
    %cst_15 = arith.constant dense<0.000000e+00> : vector<8x128xf32>
    %29 = tpu.matmul %27, %8, %cst_15 {dimension_numbers = #tpu.dot_dimension_numbers<[1], [0], [0], [1], [0, 0, 1, 1], [], []>} : vector<8x128xf32>, vector<128x128xf32>, vector<8x128xf32> -> vector<8x128xf32>
    %30 = arith.addf %28, %29 : vector<8x128xf32>
    %31 = vector.extract_strided_slice %6 {offsets = [56, 0], sizes = [8, 128], strides = [1, 1]} : vector<64x128xf32> to vector<8x128xf32>
    %cst_16 = arith.constant dense<0.000000e+00> : vector<8x128xf32>
    %32 = tpu.matmul %30, %8, %cst_16 {dimension_numbers = #tpu.dot_dimension_numbers<[1], [0], [0], [1], [0, 0, 1, 1], [], []>} : vector<8x128xf32>, vector<128x128xf32>, vector<8x128xf32> -> vector<8x128xf32>
    %33 = arith.addf %31, %32 : vector<8x128xf32>
    %c0_17 = arith.constant 0 : index
    %c0_18 = arith.constant 0 : index
    %34 = vector.load %arg10[%c0_17, %c0_18] : memref<8x128xf32, #tpu.memory_space<vmem>>, vector<8x128xf32>
    tpu.vector_store %arg10[%c0_17, %c0_18], %33 {strides = array<i32>} : memref<8x128xf32, #tpu.memory_space<vmem>>, vector<8x128xf32>,
    %35 = tpu.concatenate %12, %15, %18, %21, %24, %27, %30, %33 in 0 : vector<8x128xf32>, vector<8x128xf32>, vector<8x128xf32>, vector<8x128xf32>, vector<8x128xf32>, vector<8x128xf32>, vector<8x128xf32>, vector<8x128xf32> -> vector<64x128xf32>
    %36 = tpu.concatenate %9, %12, %15, %18, %21, %24, %27, %30 in 0 : vector<8x128xf32>, vector<8x128xf32>, vector<8x128xf32>, vector<8x128xf32>, vector<8x128xf32>, vector<8x128xf32>, vector<8x128xf32>, vector<8x128xf32> -> vector<64x128xf32>
    %c0_19 = arith.constant 0 : index
    %c0_20 = arith.constant 0 : index
    %37 = vector.load %arg5[%c0_19, %c0_20] : memref<128x128xf32, #tpu.memory_space<vmem>>, vector<128x128xf32>
    %cst_21 = arith.constant dense<0.000000e+00> : vector<64x128xf32>
    %38 = tpu.matmul %36, %37, %cst_21 {dimension_numbers = #tpu.dot_dimension_numbers<[1], [0], [0], [1], [0, 0, 1, 1], [], []>} : vector<64x128xf32>, vector<128x128xf32>, vector<64x128xf32> -> vector<64x128xf32>
    %39 = arith.addf %7, %38 : vector<64x128xf32>
    %c0_22 = arith.constant 0 : index
    %c0_23 = arith.constant 0 : index
    %40 = vector.load %arg6[%c0_22, %c0_23] : memref<128x128xf32, #tpu.memory_space<vmem>>, vector<128x128xf32>
    %cst_24 = arith.constant dense<0.000000e+00> : vector<64x128xf32>
    %41 = tpu.matmul %35, %40, %cst_24 {dimension_numbers = #tpu.dot_dimension_numbers<[1], [0], [0], [1], [0, 0, 1, 1], [], []>} : vector<64x128xf32>, vector<128x128xf32>, vector<64x128xf32> -> vector<64x128xf32>
    %c0_25 = arith.constant 0 : index
    %c0_26 = arith.constant 0 : index
    %42 = vector.load %arg7[%c0_25, %c0_26] : memref<128x128xf32, #tpu.memory_space<vmem>>, vector<128x128xf32>
    %cst_27 = arith.constant dense<0.000000e+00> : vector<64x128xf32>
    %43 = tpu.matmul %39, %42, %cst_27 {dimension_numbers = #tpu.dot_dimension_numbers<[1], [0], [0], [1], [0, 0, 1, 1], [], []>} : vector<64x128xf32>, vector<128x128xf32>, vector<64x128xf32> -> vector<64x128xf32>
    %44 = arith.addf %41, %43 : vector<64x128xf32>
    %c0_28 = arith.constant 0 : index
    %c0_29 = arith.constant 0 : index
    %45 = vector.load %arg8[%c0_28, %c0_29] : memref<1x128xf32, #tpu.memory_space<vmem>>, vector<1x128xf32>
    %46 = vector.broadcast %45 : vector<1x128xf32> to vector<64x128xf32>
    %47 = arith.addf %44, %46 : vector<64x128xf32>
    %cst_30 = arith.constant dense<0xFF800000> : vector<64xf32>
    %48 = vector.multi_reduction <maximumf>, %47, %cst_30 [1] : vector<64x128xf32> to vector<64xf32>
    %49 = vector.shape_cast %48 : vector<64xf32> to vector<64x1xf32>
    %50 = vector.broadcast %49 : vector<64x1xf32> to vector<64x128xf32>
    %51 = arith.subf %47, %50 : vector<64x128xf32>
    %52 = math.exp %51 : vector<64x128xf32>
    %cst_31 = arith.constant dense<0.000000e+00> : vector<64xf32>
    %53 = vector.multi_reduction <add>, %52, %cst_31 [1] : vector<64x128xf32> to vector<64xf32>
    %54 = vector.shape_cast %53 : vector<64xf32> to vector<64x1xf32>
    %55 = math.log %54 : vector<64x1xf32>
    %56 = vector.broadcast %55 : vector<64x1xf32> to vector<64x128xf32>
    %57 = arith.subf %51, %56 : vector<64x128xf32>
    %c0_32 = arith.constant 0 : index
    %c0_33 = arith.constant 0 : index
    %58 = vector.load %arg9[%c0_32, %c0_33] : memref<64x128xf32, #tpu.memory_space<vmem>>, vector<64x128xf32>
    tpu.vector_store %arg9[%c0_32, %c0_33], %57 {strides = array<i32>} : memref<64x128xf32, #tpu.memory_space<vmem>>, vector<64x128xf32>,
    return
  }
}

</mosaic_0001>

<llo_original>
// kernel: rnn_forward_seq.1
$region0: #{rnn_forward_seq.1}
  #allocation0 [shape = 'u32[]', space=smem, size = 0x4, offset = 0x4, fixed_abs, tag = 'smem constant byte address 0x4 - core index']
  #allocation1 [shape = 'u32[144,128]{1,0:T(1,128)}', space=vmem, size = 0x12000, scoped, tag = 'internal scratch']
  %s0 = inlined_call_operand.vmem [shape: f32[64,128], index: 0, kind: input, shape index: {}]
  %s1 = inlined_call_operand.vmem [shape: f32[8,128], index: 1, kind: input, shape index: {}]
  %s2 = inlined_call_operand.hbm [shape: f32[128,256], index: 2, kind: input, shape index: {}]
  %s3 = inlined_call_operand.vmem [shape: f32[1,256], index: 3, kind: input, shape index: {}]
  %s4 = inlined_call_operand.vmem [shape: f32[128,128], index: 4, kind: input, shape index: {}]
  %s5 = inlined_call_operand.hbm [shape: f32[128,128], index: 5, kind: input, shape index: {}]
  %s6 = inlined_call_operand.hbm [shape: f32[128,128], index: 6, kind: input, shape index: {}]
  %s7 = inlined_call_operand.hbm [shape: f32[128,128], index: 7, kind: input, shape index: {}]
  %s8 = inlined_call_operand.vmem [shape: f32[1,128], index: 8, kind: input, shape index: {}]
  %s9 = inlined_call_operand.vmem [shape: f32[64,128], index: 9, kind: output, shape index: {0}]
  %s10 = inlined_call_operand.vmem [shape: f32[8,128], index: 10, kind: output, shape index: {1}]
  %11 = xla_tuple %s9, %s10
  %s12 = sld [smem:[#allocation0]]
  $region70: #{rnn_forward_seq.1} parent=0
    _
  %s14 = ssub.s32 1, %s12
  %s15 = scalar_select 0, %s14, %s12
  $region1: #{rnn_forward_seq.1} parent=0
    #allocation2 [shape = 'u8[131072]{0}', space=vmem, size = 0x20000, scoped, tag = 'input window, operand 2, single buffered']
    #allocation3 [shape = 's32[1]{0}', space=sflag, size = 0x4, scoped, tag = 'scoped memory for rnn_forward_seq.1']
    #allocation4 [shape = 'u8[65536]{0}', space=vmem, size = 0x10000, scoped, tag = 'input window, operand 5, single buffered']
    #allocation5 [shape = 's32[1]{0}', space=sflag, size = 0x4, scoped, tag = 'scoped memory for rnn_forward_seq.1']
    #allocation6 [shape = 'u8[65536]{0}', space=vmem, size = 0x10000, scoped, tag = 'input window, operand 6, single buffered']
    #allocation7 [shape = 'u8[65536]{0}', space=vmem, size = 0x10000, scoped, tag = 'input window, operand 7, single buffered']
    #allocation8 [shape = 's32[1]{0}', space=sflag, size = 0x4, scoped, tag = 'scoped memory for rnn_forward_seq.1']
    %16 = vsyncpa [#allocation3], 0
    %17 = vsyncpa [#allocation5], 0
    %18 = vsyncpa [#allocation8], 0
    // Predicated region
    $region2: #{rnn_forward_seq.1} parent=1 // pred_check
      _
    $region3: #{rnn_forward_seq.1} parent=1 // pred_check_branch
      %20 = sbr.rel (0) target = $region5
    $region4: #{rnn_forward_seq.1} parent=1 // pred_region
      _
    $region5: #{rnn_forward_seq.1} parent=1 // pred_fallthru
      _
    // Predicated region
    $region6: #{rnn_forward_seq.1} parent=1 // pred_check
      _
    $region7: #{rnn_forward_seq.1} parent=1 // pred_check_branch
      %22 = sbr.rel (0) target = $region9
    $region8: #{rnn_forward_seq.1} parent=1 // pred_region
      _
    $region9: #{rnn_forward_seq.1} parent=1 // pred_fallthru
      _
    // Predicated region
    $region10: #{rnn_forward_seq.1} parent=1 // pred_check
      _
    $region11: #{rnn_forward_seq.1} parent=1 // pred_check_branch
      %24 = sbr.rel (0) target = $region13
    $region12: #{rnn_forward_seq.1} parent=1 // pred_region
      %s26 = ssub.s32 4096, 4096
      %27 = vsyncadd [#allocation3], %s26
      %s28 = sshll.u32 [#allocation2], 4
      %s29 = int_to_ptr.vmem [resolvable:$true] %s28
      %34 = dma.hbm_to_vmem [thread:$0]  %s2, 4096, %s29, [#allocation3], 256, 256, 16
    $region13: #{rnn_forward_seq.1} parent=1 // pred_fallthru
      _
    // Predicated region
    $region14: #{rnn_forward_seq.1} parent=1 // pred_check
      _
    $region15: #{rnn_forward_seq.1} parent=1 // pred_check_branch
      %36 = sbr.rel (0) target = $region17
    $region16: #{rnn_forward_seq.1} parent=1 // pred_region
      _
    $region17: #{rnn_forward_seq.1} parent=1 // pred_fallthru
      _
    // Predicated region
    $region18: #{rnn_forward_seq.1} parent=1 // pred_check
      _
    $region19: #{rnn_forward_seq.1} parent=1 // pred_check_branch
      %38 = sbr.rel (0) target = $region21
    $region20: #{rnn_forward_seq.1} parent=1 // pred_region
      _
    $region21: #{rnn_forward_seq.1} parent=1 // pred_fallthru
      _
    // Predicated region
    $region22: #{rnn_forward_seq.1} parent=1 // pred_check
      _
    $region23: #{rnn_forward_seq.1} parent=1 // pred_check_branch
      %40 = sbr.rel (0) target = $region25
    $region24: #{rnn_forward_seq.1} parent=1 // pred_region
      %s42 = ssub.s32 2048, 2048
      %43 = vsyncadd [#allocation5], %s42
      %s44 = sshll.u32 [#allocation4], 4
      %s45 = int_to_ptr.vmem [resolvable:$true] %s44
      %50 = dma.hbm_to_vmem [thread:$0]  %s5, 2048, %s45, [#allocation5], 128, 128, 8
    $region25: #{rnn_forward_seq.1} parent=1 // pred_fallthru
      _
    // Predicated region
    $region26: #{rnn_forward_seq.1} parent=1 // pred_check
      _
    $region27: #{rnn_forward_seq.1} parent=1 // pred_check_branch
      %52 = sbr.rel (0) target = $region29
    $region28: #{rnn_forward_seq.1} parent=1 // pred_region
      %s54 = ssub.s32 2048, 2048
      %55 = vsyncadd [#allocation5], %s54
      %s56 = sshll.u32 [#allocation6], 4
      %s57 = int_to_ptr.vmem [resolvable:$true] %s56
      %62 = dma.hbm_to_vmem [thread:$0]  %s6, 2048, %s57, [#allocation5], 128, 128, 8
    $region29: #{rnn_forward_seq.1} parent=1 // pred_fallthru
      _
    // Predicated region
    $region30: #{rnn_forward_seq.1} parent=1 // pred_check
      _
    $region31: #{rnn_forward_seq.1} parent=1 // pred_check_branch
      %64 = sbr.rel (0) target = $region33
    $region32: #{rnn_forward_seq.1} parent=1 // pred_region
      %s66 = ssub.s32 2048, 2048
      %67 = vsyncadd [#allocation8], %s66
      %s68 = sshll.u32 [#allocation7], 4
      %s69 = int_to_ptr.vmem [resolvable:$true] %s68
      %74 = dma.hbm_to_vmem [thread:$0]  %s7, 2048, %s69, [#allocation8], 128, 128, 8
    $region33: #{rnn_forward_seq.1} parent=1 // pred_fallthru
      _
    // Predicated region
    $region34: #{rnn_forward_seq.1} parent=1 // pred_check
      _
    $region35: #{rnn_forward_seq.1} parent=1 // pred_check_branch
      %76 = sbr.rel (0) target = $region37
    $region36: #{rnn_forward_seq.1} parent=1 // pred_region
      _
    $region37: #{rnn_forward_seq.1} parent=1 // pred_fallthru
      _
    // Predicated region
    $region38: #{rnn_forward_seq.1} parent=1 // pred_check
      _
    $region39: #{rnn_forward_seq.1} parent=1 // pred_check_branch
      %78 = sbr.rel (0) target = $region41
    $region40: #{rnn_forward_seq.1} parent=1 // pred_region
      %79 = dma.done [#allocation3], 4096
    $region41: #{rnn_forward_seq.1} parent=1 // pred_fallthru
      _
    // Predicated region
    $region42: #{rnn_forward_seq.1} parent=1 // pred_check
      _
    $region43: #{rnn_forward_seq.1} parent=1 // pred_check_branch
      %81 = sbr.rel (0) target = $region45
    $region44: #{rnn_forward_seq.1} parent=1 // pred_region
      %82 = dma.done [#allocation5], 2048
    $region45: #{rnn_forward_seq.1} parent=1 // pred_fallthru
      _
    // Predicated region
    $region46: #{rnn_forward_seq.1} parent=1 // pred_check
      _
    $region47: #{rnn_forward_seq.1} parent=1 // pred_check_branch
      %84 = sbr.rel (0) target = $region49
    $region48: #{rnn_forward_seq.1} parent=1 // pred_region
      %85 = dma.done [#allocation5], 2048
    $region49: #{rnn_forward_seq.1} parent=1 // pred_fallthru
      _
    // Predicated region
    $region50: #{rnn_forward_seq.1} parent=1 // pred_check
      _
    $region51: #{rnn_forward_seq.1} parent=1 // pred_check_branch
      %87 = sbr.rel (0) target = $region53
    $region52: #{rnn_forward_seq.1} parent=1 // pred_region
      %88 = dma.done [#allocation8], 2048
    $region53: #{rnn_forward_seq.1} parent=1 // pred_fallthru
      _
    %v89 = vld [vmem:[%s0] sm:$0xff]
    %v90 = vld [vmem:[%s0 + $0x8] sm:$0xff]
    %v91 = vld [vmem:[%s0 + $0x10] sm:$0xff]
    %v92 = vld [vmem:[%s0 + $0x18] sm:$0xff]
    %v93 = vld [vmem:[%s0 + $0x20] sm:$0xff]
    %v94 = vld [vmem:[%s0 + $0x28] sm:$0xff]
    %v95 = vld [vmem:[%s0 + $0x30] sm:$0xff]
    %v96 = vld [vmem:[%s0 + $0x38] sm:$0xff]
    %v97 = vld [vmem:[#allocation2] sm:$0xff]
    %v98 = vld [vmem:[#allocation2 + $0x8] sm:$0xff]
    %v99 = vld [vmem:[#allocation2 + $0x10] sm:$0xff]
    %v100 = vld [vmem:[#allocation2 + $0x18] sm:$0xff]
    %v101 = vld [vmem:[#allocation2 + $0x20] sm:$0xff]
    %v102 = vld [vmem:[#allocation2 + $0x28] sm:$0xff]
    %v103 = vld [vmem:[#allocation2 + $0x30] sm:$0xff]
    %v104 = vld [vmem:[#allocation2 + $0x38] sm:$0xff]
    %v105 = vld [vmem:[#allocation2 + $0x40] sm:$0xff]
    %v106 = vld [vmem:[#allocation2 + $0x48] sm:$0xff]
    %v107 = vld [vmem:[#allocation2 + $0x50] sm:$0xff]
    %v108 = vld [vmem:[#allocation2 + $0x58] sm:$0xff]
    %v109 = vld [vmem:[#allocation2 + $0x60] sm:$0xff]
    %v110 = vld [vmem:[#allocation2 + $0x68] sm:$0xff]
    %v111 = vld [vmem:[#allocation2 + $0x70] sm:$0xff]
    %v112 = vld [vmem:[#allocation2 + $0x78] sm:$0xff]
    %v113 = vld [vmem:[#allocation2 + $0x80] sm:$0xff]
    %v114 = vld [vmem:[#allocation2 + $0x88] sm:$0xff]
    %v115 = vld [vmem:[#allocation2 + $0x90] sm:$0xff]
    %v116 = vld [vmem:[#allocation2 + $0x98] sm:$0xff]
    %v117 = vld [vmem:[#allocation2 + $0xa0] sm:$0xff]
    %v118 = vld [vmem:[#allocation2 + $0xa8] sm:$0xff]
    %v119 = vld [vmem:[#allocation2 + $0xb0] sm:$0xff]
    %v120 = vld [vmem:[#allocation2 + $0xb8] sm:$0xff]
    %v121 = vld [vmem:[#allocation2 + $0xc0] sm:$0xff]
    %v122 = vld [vmem:[#allocation2 + $0xc8] sm:$0xff]
    %v123 = vld [vmem:[#allocation2 + $0xd0] sm:$0xff]
    %v124 = vld [vmem:[#allocation2 + $0xd8] sm:$0xff]
    %v125 = vld [vmem:[#allocation2 + $0xe0] sm:$0xff]
    %v126 = vld [vmem:[#allocation2 + $0xe8] sm:$0xff]
    %v127 = vld [vmem:[#allocation2 + $0xf0] sm:$0xff]
    %v128 = vld [vmem:[#allocation2 + $0xf8] sm:$0xff]
    %v129 = vld [vmem:[%s3] sm:$0x3]
    %v131 = vlaneseq
    %v132 = vshrl.u32 %v131, 7
    %v133 = vsub.s32 0, %v132
    %v134 = vrot.slane %v129, %v133
    %v135 = vlaneseq
    %v136 = vshrl.u32 %v135, 7
    %v137 = vsub.s32 1, %v136
    %v138 = vrot.slane %v129, %v137
    %141 = vmatprep.subr.mxu0 %v128
    %142 = vmatpush1.msra.mxu0 %v127
    %143 = vmatprep.subr.mxu0 %v126
    %144 = vmatpush1.msra.mxu0 %v125
    %145 = vmatprep.subr.mxu0 %v124
    %146 = vmatpush1.msra.mxu0 %v123
    %147 = vmatprep.subr.mxu0 %v122
    %148 = vmatpush1.msra.mxu0 %v121
    %149 = vmatprep.subr.mxu0 %v120
    %150 = vmatpush1.msra.mxu0 %v119
    %151 = vmatprep.subr.mxu0 %v118
    %152 = vmatpush1.msra.mxu0 %v117
    %153 = vmatprep.subr.mxu0 %v116
    %154 = vmatpush1.msra.mxu0 %v115
    %155 = vmatprep.subr.mxu0 %v114
    %156 = vmatpush1.msra.mxu0 %v113
    %157 = vmatprep.subr.mxu0 %v112
    %158 = vmatpush1.msra.mxu0 %v111
    %159 = vmatprep.subr.mxu0 %v110
    %160 = vmatpush1.msra.mxu0 %v109
    %161 = vmatprep.subr.mxu0 %v108
    %162 = vmatpush1.msra.mxu0 %v107
    %163 = vmatprep.subr.mxu0 %v106
    %164 = vmatpush1.msra.mxu0 %v105
    %165 = vmatprep.subr.mxu0 %v104
    %166 = vmatpush1.msra.mxu0 %v103
    %167 = vmatprep.subr.mxu0 %v102
    %168 = vmatpush1.msra.mxu0 %v101
    %169 = vmatprep.subr.mxu0 %v100
    %170 = vmatpush1.msra.mxu0 %v99
    %171 = vmatprep.subr.mxu0 %v98
    %172 = vmatpush1.msra.mxu0 %v97
    %173 = vmatprep.subr.mxu0 0.0
    %174 = vmatpush2.msra.mxu0 0.0
    %175 = vmatprep.subr.mxu0 0.0
    %176 = vmatpush2.msra.mxu0 0.0
    %177 = vmatprep.subr.mxu0 0.0
    %178 = vmatpush2.msra.mxu0 0.0
    %179 = vmatprep.subr.mxu0 0.0
    %180 = vmatpush2.msra.mxu0 0.0
    %181 = vmatprep.subr.mxu0 0.0
    %182 = vmatpush2.msra.mxu0 0.0
    %183 = vmatprep.subr.mxu0 0.0
    %184 = vmatpush2.msra.mxu0 0.0
    %185 = vmatprep.subr.mxu0 0.0
    %186 = vmatpush2.msra.mxu0 0.0
    %187 = vmatprep.subr.mxu0 0.0
    %188 = vmatpush2.msra.mxu0 0.0
    %189 = vmatprep.subr.mxu0 0.0
    %190 = vmatpush2.msra.mxu0 0.0
    %191 = vmatprep.subr.mxu0 0.0
    %192 = vmatpush2.msra.mxu0 0.0
    %193 = vmatprep.subr.mxu0 0.0
    %194 = vmatpush2.msra.mxu0 0.0
    %195 = vmatprep.subr.mxu0 0.0
    %196 = vmatpush2.msra.mxu0 0.0
    %197 = vmatprep.subr.mxu0 0.0
    %198 = vmatpush2.msra.mxu0 0.0
    %199 = vmatprep.subr.mxu0 0.0
    %200 = vmatpush2.msra.mxu0 0.0
    %201 = vmatprep.subr.mxu0 0.0
    %202 = vmatpush2.msra.mxu0 0.0
    %203 = vmatprep.subr.mxu0 0.0
    %204 = vmatpush2.msra.mxu0 0.0
    %205 = vmatprep.mubr.f32.mxu0 0.0
    %206 = vmatmul.mubr.f32.gmra.mxu0 %v89
    %v207 = vpop.f32.mrf.mxu0
    %v208 = vadd.f32 %v134, %v207
    %v209 = vpop.f32.mrf.mxu0
    %v210 = vadd.f32 %v138, %v209
    %211 = vmatprep.mubr.f32.mxu0 0.0
    %212 = vmatmul.mubr.f32.gmra.mxu0 %v90
    %v213 = vpop.f32.mrf.mxu0
    %v214 = vadd.f32 %v134, %v213
    %v215 = vpop.f32.mrf.mxu0
    %v216 = vadd.f32 %v138, %v215
    %217 = vmatprep.mubr.f32.mxu0 0.0
    %218 = vmatmul.mubr.f32.gmra.mxu0 %v91
    %v219 = vpop.f32.mrf.mxu0
    %v220 = vadd.f32 %v134, %v219
    %v221 = vpop.f32.mrf.mxu0
    %v222 = vadd.f32 %v138, %v221
    %223 = vmatprep.mubr.f32.mxu0 0.0
    %224 = vmatmul.mubr.f32.gmra.mxu0 %v92
    %v225 = vpop.f32.mrf.mxu0
    %v226 = vadd.f32 %v134, %v225
    %v227 = vpop.f32.mrf.mxu0
    %v228 = vadd.f32 %v138, %v227
    %229 = vmatprep.mubr.f32.mxu0 0.0
    %230 = vmatmul.mubr.f32.gmra.mxu0 %v93
    %v231 = vpop.f32.mrf.mxu0
    %v232 = vadd.f32 %v134, %v231
    %v233 = vpop.f32.mrf.mxu0
    %v234 = vadd.f32 %v138, %v233
    %235 = vmatprep.mubr.f32.mxu0 0.0
    %236 = vmatmul.mubr.f32.gmra.mxu0 %v94
    %v237 = vpop.f32.mrf.mxu0
    %v238 = vadd.f32 %v134, %v237
    %v239 = vpop.f32.mrf.mxu0
    %v240 = vadd.f32 %v138, %v239
    %241 = vmatprep.mubr.f32.mxu0 0.0
    %242 = vmatmul.mubr.f32.gmra.mxu0 %v95
    %v243 = vpop.f32.mrf.mxu0
    %v244 = vadd.f32 %v134, %v243
    %v245 = vpop.f32.mrf.mxu0
    %v246 = vadd.f32 %v138, %v245
    %247 = vmatprep.mubr.f32.mxu0 0.0
    %248 = vmatmul.mubr.f32.gmra.mxu0 %v96
    %v249 = vpop.f32.mrf.mxu0
    %v250 = vadd.f32 %v134, %v249
    %v251 = vpop.f32.mrf.mxu0
    %v252 = vadd.f32 %v138, %v251
    %253 = vdwg.mxu0
    %v254 = vld [vmem:[%s4] sm:$0xff]
    %v255 = vld [vmem:[%s4 + $0x8] sm:$0xff]
    %v256 = vld [vmem:[%s4 + $0x10] sm:$0xff]
    %v257 = vld [vmem:[%s4 + $0x18] sm:$0xff]
    %v258 = vld [vmem:[%s4 + $0x20] sm:$0xff]
    %v259 = vld [vmem:[%s4 + $0x28] sm:$0xff]
    %v260 = vld [vmem:[%s4 + $0x30] sm:$0xff]
    %v261 = vld [vmem:[%s4 + $0x38] sm:$0xff]
    %v262 = vld [vmem:[%s4 + $0x40] sm:$0xff]
    %v263 = vld [vmem:[%s4 + $0x48] sm:$0xff]
    %v264 = vld [vmem:[%s4 + $0x50] sm:$0xff]
    %v265 = vld [vmem:[%s4 + $0x58] sm:$0xff]
    %v266 = vld [vmem:[%s4 + $0x60] sm:$0xff]
    %v267 = vld [vmem:[%s4 + $0x68] sm:$0xff]
    %v268 = vld [vmem:[%s4 + $0x70] sm:$0xff]
    %v269 = vld [vmem:[%s4 + $0x78] sm:$0xff]
    %v270 = vld [vmem:[%s1] sm:$0xff]
    %271 = vmatprep.subr.mxu0 0.0
    %272 = vmatpush1.msra.mxu0 %v269
    %273 = vmatprep.subr.mxu0 0.0
    %274 = vmatpush1.msra.mxu0 %v268
    %275 = vmatprep.subr.mxu0 0.0
    %276 = vmatpush1.msra.mxu0 %v267
    %277 = vmatprep.subr.mxu0 0.0
    %278 = vmatpush1.msra.mxu0 %v266
    %279 = vmatprep.subr.mxu0 0.0
    %280 = vmatpush1.msra.mxu0 %v265
    %281 = vmatprep.subr.mxu0 0.0
    %282 = vmatpush1.msra.mxu0 %v264
    %283 = vmatprep.subr.mxu0 0.0
    %284 = vmatpush1.msra.mxu0 %v263
    %285 = vmatprep.subr.mxu0 0.0
    %286 = vmatpush1.msra.mxu0 %v262
    %287 = vmatprep.subr.mxu0 0.0
    %288 = vmatpush1.msra.mxu0 %v261
    %289 = vmatprep.subr.mxu0 0.0
    %290 = vmatpush1.msra.mxu0 %v260
    %291 = vmatprep.subr.mxu0 0.0
    %292 = vmatpush1.msra.mxu0 %v259
    %293 = vmatprep.subr.mxu0 0.0
    %294 = vmatpush1.msra.mxu0 %v258
    %295 = vmatprep.subr.mxu0 0.0
    %296 = vmatpush1.msra.mxu0 %v257
    %297 = vmatprep.subr.mxu0 0.0
    %298 = vmatpush1.msra.mxu0 %v256
    %299 = vmatprep.subr.mxu0 0.0
    %300 = vmatpush1.msra.mxu0 %v255
    %301 = vmatprep.subr.mxu0 0.0
    %302 = vmatpush1.msra.mxu0 %v254
    %303 = vmatprep.subr.mxu0 0.0
    %304 = vmatpush2.msra.mxu0 0.0
    %305 = vmatprep.subr.mxu0 0.0
    %306 = vmatpush2.msra.mxu0 0.0
    %307 = vmatprep.subr.mxu0 0.0
    %308 = vmatpush2.msra.mxu0 0.0
    %309 = vmatprep.subr.mxu0 0.0
    %310 = vmatpush2.msra.mxu0 0.0
    %311 = vmatprep.subr.mxu0 0.0
    %312 = vmatpush2.msra.mxu0 0.0
    %313 = vmatprep.subr.mxu0 0.0
    %314 = vmatpush2.msra.mxu0 0.0
    %315 = vmatprep.subr.mxu0 0.0
    %316 = vmatpush2.msra.mxu0 0.0
    %317 = vmatprep.subr.mxu0 0.0
    %318 = vmatpush2.msra.mxu0 0.0
    %319 = vmatprep.subr.mxu0 0.0
    %320 = vmatpush2.msra.mxu0 0.0
    %321 = vmatprep.subr.mxu0 0.0
    %322 = vmatpush2.msra.mxu0 0.0
    %323 = vmatprep.subr.mxu0 0.0
    %324 = vmatpush2.msra.mxu0 0.0
    %325 = vmatprep.subr.mxu0 0.0
    %326 = vmatpush2.msra.mxu0 0.0
    %327 = vmatprep.subr.mxu0 0.0
    %328 = vmatpush2.msra.mxu0 0.0
    %329 = vmatprep.subr.mxu0 0.0
    %330 = vmatpush2.msra.mxu0 0.0
    %331 = vmatprep.subr.mxu0 0.0
    %332 = vmatpush2.msra.mxu0 0.0
    %333 = vmatprep.subr.mxu0 0.0
    %334 = vmatpush2.msra.mxu0 0.0
    %335 = vmatprep.mubr.f32.mxu0 0.0
    %336 = vmatmul.mubr.f32.gmra.mxu0 %v270
    %v337 = vpop.f32.mrf.mxu0
    %v338 = vadd.f32 0.0, %v337
    %v339 = vpop.f32.mrf.mxu0
    %340 = vdwg.mxu0
    %v341 = vadd.f32 %v208, %v338
    %342 = vmatprep.subr.mxu0 0.0
    %343 = vmatpush1.msra.mxu0 %v269
    %344 = vmatprep.subr.mxu0 0.0
    %345 = vmatpush1.msra.mxu0 %v268
    %346 = vmatprep.subr.mxu0 0.0
    %347 = vmatpush1.msra.mxu0 %v267
    %348 = vmatprep.subr.mxu0 0.0
    %349 = vmatpush1.msra.mxu0 %v266
    %350 = vmatprep.subr.mxu0 0.0
    %351 = vmatpush1.msra.mxu0 %v265
    %352 = vmatprep.subr.mxu0 0.0
    %353 = vmatpush1.msra.mxu0 %v264
    %354 = vmatprep.subr.mxu0 0.0
    %355 = vmatpush1.msra.mxu0 %v263
    %356 = vmatprep.subr.mxu0 0.0
    %357 = vmatpush1.msra.mxu0 %v262
    %358 = vmatprep.subr.mxu0 0.0
    %359 = vmatpush1.msra.mxu0 %v261
    %360 = vmatprep.subr.mxu0 0.0
    %361 = vmatpush1.msra.mxu0 %v260
    %362 = vmatprep.subr.mxu0 0.0
    %363 = vmatpush1.msra.mxu0 %v259
    %364 = vmatprep.subr.mxu0 0.0
    %365 = vmatpush1.msra.mxu0 %v258
    %366 = vmatprep.subr.mxu0 0.0
    %367 = vmatpush1.msra.mxu0 %v257
    %368 = vmatprep.subr.mxu0 0.0
    %369 = vmatpush1.msra.mxu0 %v256
    %370 = vmatprep.subr.mxu0 0.0
    %371 = vmatpush1.msra.mxu0 %v255
    %372 = vmatprep.subr.mxu0 0.0
    %373 = vmatpush1.msra.mxu0 %v254
    %374 = vmatprep.subr.mxu0 0.0
    %375 = vmatpush2.msra.mxu0 0.0
    %376 = vmatprep.subr.mxu0 0.0
    %377 = vmatpush2.msra.mxu0 0.0
    %378 = vmatprep.subr.mxu0 0.0
    %379 = vmatpush2.msra.mxu0 0.0
    %380 = vmatprep.subr.mxu0 0.0
    %381 = vmatpush2.msra.mxu0 0.0
    %382 = vmatprep.subr.mxu0 0.0
    %383 = vmatpush2.msra.mxu0 0.0
    %384 = vmatprep.subr.mxu0 0.0
    %385 = vmatpush2.msra.mxu0 0.0
    %386 = vmatprep.subr.mxu0 0.0
    %387 = vmatpush2.msra.mxu0 0.0
    %388 = vmatprep.subr.mxu0 0.0
    %389 = vmatpush2.msra.mxu0 0.0
    %390 = vmatprep.subr.mxu0 0.0
    %391 = vmatpush2.msra.mxu0 0.0
    %392 = vmatprep.subr.mxu0 0.0
    %393 = vmatpush2.msra.mxu0 0.0
    %394 = vmatprep.subr.mxu0 0.0
    %395 = vmatpush2.msra.mxu0 0.0
    %396 = vmatprep.subr.mxu0 0.0
    %397 = vmatpush2.msra.mxu0 0.0
    %398 = vmatprep.subr.mxu0 0.0
    %399 = vmatpush2.msra.mxu0 0.0
    %400 = vmatprep.subr.mxu0 0.0
    %401 = vmatpush2.msra.mxu0 0.0
    %402 = vmatprep.subr.mxu0 0.0
    %403 = vmatpush2.msra.mxu0 0.0
    %404 = vmatprep.subr.mxu0 0.0
    %405 = vmatpush2.msra.mxu0 0.0
    %406 = vmatprep.mubr.f32.mxu0 0.0
    %407 = vmatmul.mubr.f32.gmra.mxu0 %v341
    %v408 = vpop.f32.mrf.mxu0
    %v409 = vadd.f32 0.0, %v408
    %v410 = vpop.f32.mrf.mxu0
    %411 = vdwg.mxu0
    %v412 = vadd.f32 %v214, %v409
    %413 = vmatprep.subr.mxu0 0.0
    %414 = vmatpush1.msra.mxu0 %v269
    %415 = vmatprep.subr.mxu0 0.0
    %416 = vmatpush1.msra.mxu0 %v268
    %417 = vmatprep.subr.mxu0 0.0
    %418 = vmatpush1.msra.mxu0 %v267
    %419 = vmatprep.subr.mxu0 0.0
    %420 = vmatpush1.msra.mxu0 %v266
    %421 = vmatprep.subr.mxu0 0.0
    %422 = vmatpush1.msra.mxu0 %v265
    %423 = vmatprep.subr.mxu0 0.0
    %424 = vmatpush1.msra.mxu0 %v264
    %425 = vmatprep.subr.mxu0 0.0
    %426 = vmatpush1.msra.mxu0 %v263
    %427 = vmatprep.subr.mxu0 0.0
    %428 = vmatpush1.msra.mxu0 %v262
    %429 = vmatprep.subr.mxu0 0.0
    %430 = vmatpush1.msra.mxu0 %v261
    %431 = vmatprep.subr.mxu0 0.0
    %432 = vmatpush1.msra.mxu0 %v260
    %433 = vmatprep.subr.mxu0 0.0
    %434 = vmatpush1.msra.mxu0 %v259
    %435 = vmatprep.subr.mxu0 0.0
    %436 = vmatpush1.msra.mxu0 %v258
    %437 = vmatprep.subr.mxu0 0.0
    %438 = vmatpush1.msra.mxu0 %v257
    %439 = vmatprep.subr.mxu0 0.0
    %440 = vmatpush1.msra.mxu0 %v256
    %441 = vmatprep.subr.mxu0 0.0
    %442 = vmatpush1.msra.mxu0 %v255
    %443 = vmatprep.subr.mxu0 0.0
    %444 = vmatpush1.msra.mxu0 %v254
    %445 = vmatprep.subr.mxu0 0.0
    %446 = vmatpush2.msra.mxu0 0.0
    %447 = vmatprep.subr.mxu0 0.0
    %448 = vmatpush2.msra.mxu0 0.0
    %449 = vmatprep.subr.mxu0 0.0
    %450 = vmatpush2.msra.mxu0 0.0
    %451 = vmatprep.subr.mxu0 0.0
    %452 = vmatpush2.msra.mxu0 0.0
    %453 = vmatprep.subr.mxu0 0.0
    %454 = vmatpush2.msra.mxu0 0.0
    %455 = vmatprep.subr.mxu0 0.0
    %456 = vmatpush2.msra.mxu0 0.0
    %457 = vmatprep.subr.mxu0 0.0
    %458 = vmatpush2.msra.mxu0 0.0
    %459 = vmatprep.subr.mxu0 0.0
    %460 = vmatpush2.msra.mxu0 0.0
    %461 = vmatprep.subr.mxu0 0.0
    %462 = vmatpush2.msra.mxu0 0.0
    %463 = vmatprep.subr.mxu0 0.0
    %464 = vmatpush2.msra.mxu0 0.0
    %465 = vmatprep.subr.mxu0 0.0
    %466 = vmatpush2.msra.mxu0 0.0
    %467 = vmatprep.subr.mxu0 0.0
    %468 = vmatpush2.msra.mxu0 0.0
    %469 = vmatprep.subr.mxu0 0.0
    %470 = vmatpush2.msra.mxu0 0.0
    %471 = vmatprep.subr.mxu0 0.0
    %472 = vmatpush2.msra.mxu0 0.0
    %473 = vmatprep.subr.mxu0 0.0
    %474 = vmatpush2.msra.mxu0 0.0
    %475 = vmatprep.subr.mxu0 0.0
    %476 = vmatpush2.msra.mxu0 0.0
    %477 = vmatprep.mubr.f32.mxu0 0.0
    %478 = vmatmul.mubr.f32.gmra.mxu0 %v412
    %v479 = vpop.f32.mrf.mxu0
    %v480 = vadd.f32 0.0, %v479
    %v481 = vpop.f32.mrf.mxu0
    %482 = vdwg.mxu0
    %v483 = vadd.f32 %v220, %v480
    %484 = vmatprep.subr.mxu0 0.0
    %485 = vmatpush1.msra.mxu0 %v269
    %486 = vmatprep.subr.mxu0 0.0
    %487 = vmatpush1.msra.mxu0 %v268
    %488 = vmatprep.subr.mxu0 0.0
    %489 = vmatpush1.msra.mxu0 %v267
    %490 = vmatprep.subr.mxu0 0.0
    %491 = vmatpush1.msra.mxu0 %v266
    %492 = vmatprep.subr.mxu0 0.0
    %493 = vmatpush1.msra.mxu0 %v265
    %494 = vmatprep.subr.mxu0 0.0
    %495 = vmatpush1.msra.mxu0 %v264
    %496 = vmatprep.subr.mxu0 0.0
    %497 = vmatpush1.msra.mxu0 %v263
    %498 = vmatprep.subr.mxu0 0.0
    %499 = vmatpush1.msra.mxu0 %v262
    %500 = vmatprep.subr.mxu0 0.0
    %501 = vmatpush1.msra.mxu0 %v261
    %502 = vmatprep.subr.mxu0 0.0
    %503 = vmatpush1.msra.mxu0 %v260
    %504 = vmatprep.subr.mxu0 0.0
    %505 = vmatpush1.msra.mxu0 %v259
    %506 = vmatprep.subr.mxu0 0.0
    %507 = vmatpush1.msra.mxu0 %v258
    %508 = vmatprep.subr.mxu0 0.0
    %509 = vmatpush1.msra.mxu0 %v257
    %510 = vmatprep.subr.mxu0 0.0
    %511 = vmatpush1.msra.mxu0 %v256
    %512 = vmatprep.subr.mxu0 0.0
    %513 = vmatpush1.msra.mxu0 %v255
    %514 = vmatprep.subr.mxu0 0.0
    %515 = vmatpush1.msra.mxu0 %v254
    %516 = vmatprep.subr.mxu0 0.0
    %517 = vmatpush2.msra.mxu0 0.0
    %518 = vmatprep.subr.mxu0 0.0
    %519 = vmatpush2.msra.mxu0 0.0
    %520 = vmatprep.subr.mxu0 0.0
    %521 = vmatpush2.msra.mxu0 0.0
    %522 = vmatprep.subr.mxu0 0.0
    %523 = vmatpush2.msra.mxu0 0.0
    %524 = vmatprep.subr.mxu0 0.0
    %525 = vmatpush2.msra.mxu0 0.0
    %526 = vmatprep.subr.mxu0 0.0
    %527 = vmatpush2.msra.mxu0 0.0
    %528 = vmatprep.subr.mxu0 0.0
    %529 = vmatpush2.msra.mxu0 0.0
    %530 = vmatprep.subr.mxu0 0.0
    %531 = vmatpush2.msra.mxu0 0.0
    %532 = vmatprep.subr.mxu0 0.0
    %533 = vmatpush2.msra.mxu0 0.0
    %534 = vmatprep.subr.mxu0 0.0
    %535 = vmatpush2.msra.mxu0 0.0
    %536 = vmatprep.subr.mxu0 0.0
    %537 = vmatpush2.msra.mxu0 0.0
    %538 = vmatprep.subr.mxu0 0.0
    %539 = vmatpush2.msra.mxu0 0.0
    %540 = vmatprep.subr.mxu0 0.0
    %541 = vmatpush2.msra.mxu0 0.0
    %542 = vmatprep.subr.mxu0 0.0
    %543 = vmatpush2.msra.mxu0 0.0
    %544 = vmatprep.subr.mxu0 0.0
    %545 = vmatpush2.msra.mxu0 0.0
    %546 = vmatprep.subr.mxu0 0.0
    %547 = vmatpush2.msra.mxu0 0.0
    %548 = vmatprep.mubr.f32.mxu0 0.0
    %549 = vmatmul.mubr.f32.gmra.mxu0 %v483
    %v550 = vpop.f32.mrf.mxu0
    %v551 = vadd.f32 0.0, %v550
    %v552 = vpop.f32.mrf.mxu0
    %553 = vdwg.mxu0
    %v554 = vadd.f32 %v226, %v551
    %555 = vmatprep.subr.mxu0 0.0
    %556 = vmatpush1.msra.mxu0 %v269
    %557 = vmatprep.subr.mxu0 0.0
    %558 = vmatpush1.msra.mxu0 %v268
    %559 = vmatprep.subr.mxu0 0.0
    %560 = vmatpush1.msra.mxu0 %v267
    %561 = vmatprep.subr.mxu0 0.0
    %562 = vmatpush1.msra.mxu0 %v266
    %563 = vmatprep.subr.mxu0 0.0
    %564 = vmatpush1.msra.mxu0 %v265
    %565 = vmatprep.subr.mxu0 0.0
    %566 = vmatpush1.msra.mxu0 %v264
    %567 = vmatprep.subr.mxu0 0.0
    %568 = vmatpush1.msra.mxu0 %v263
    %569 = vmatprep.subr.mxu0 0.0
    %570 = vmatpush1.msra.mxu0 %v262
    %571 = vmatprep.subr.mxu0 0.0
    %572 = vmatpush1.msra.mxu0 %v261
    %573 = vmatprep.subr.mxu0 0.0
    %574 = vmatpush1.msra.mxu0 %v260
    %575 = vmatprep.subr.mxu0 0.0
    %576 = vmatpush1.msra.mxu0 %v259
    %577 = vmatprep.subr.mxu0 0.0
    %578 = vmatpush1.msra.mxu0 %v258
    %579 = vmatprep.subr.mxu0 0.0
    %580 = vmatpush1.msra.mxu0 %v257
    %581 = vmatprep.subr.mxu0 0.0
    %582 = vmatpush1.msra.mxu0 %v256
    %583 = vmatprep.subr.mxu0 0.0
    %584 = vmatpush1.msra.mxu0 %v255
    %585 = vmatprep.subr.mxu0 0.0
    %586 = vmatpush1.msra.mxu0 %v254
    %587 = vmatprep.subr.mxu0 0.0
    %588 = vmatpush2.msra.mxu0 0.0
    %589 = vmatprep.subr.mxu0 0.0
    %590 = vmatpush2.msra.mxu0 0.0
    %591 = vmatprep.subr.mxu0 0.0
    %592 = vmatpush2.msra.mxu0 0.0
    %593 = vmatprep.subr.mxu0 0.0
    %594 = vmatpush2.msra.mxu0 0.0
    %595 = vmatprep.subr.mxu0 0.0
    %596 = vmatpush2.msra.mxu0 0.0
    %597 = vmatprep.subr.mxu0 0.0
    %598 = vmatpush2.msra.mxu0 0.0
    %599 = vmatprep.subr.mxu0 0.0
    %600 = vmatpush2.msra.mxu0 0.0
    %601 = vmatprep.subr.mxu0 0.0
    %602 = vmatpush2.msra.mxu0 0.0
    %603 = vmatprep.subr.mxu0 0.0
    %604 = vmatpush2.msra.mxu0 0.0
    %605 = vmatprep.subr.mxu0 0.0
    %606 = vmatpush2.msra.mxu0 0.0
    %607 = vmatprep.subr.mxu0 0.0
    %608 = vmatpush2.msra.mxu0 0.0
    %609 = vmatprep.subr.mxu0 0.0
    %610 = vmatpush2.msra.mxu0 0.0
    %611 = vmatprep.subr.mxu0 0.0
    %612 = vmatpush2.msra.mxu0 0.0
    %613 = vmatprep.subr.mxu0 0.0
    %614 = vmatpush2.msra.mxu0 0.0
    %615 = vmatprep.subr.mxu0 0.0
    %616 = vmatpush2.msra.mxu0 0.0
    %617 = vmatprep.subr.mxu0 0.0
    %618 = vmatpush2.msra.mxu0 0.0
    %619 = vmatprep.mubr.f32.mxu0 0.0
    %620 = vmatmul.mubr.f32.gmra.mxu0 %v554
    %v621 = vpop.f32.mrf.mxu0
    %v622 = vadd.f32 0.0, %v621
    %v623 = vpop.f32.mrf.mxu0
    %624 = vdwg.mxu0
    %v625 = vadd.f32 %v232, %v622
    %626 = vmatprep.subr.mxu0 0.0
    %627 = vmatpush1.msra.mxu0 %v269
    %628 = vmatprep.subr.mxu0 0.0
    %629 = vmatpush1.msra.mxu0 %v268
    %630 = vmatprep.subr.mxu0 0.0
    %631 = vmatpush1.msra.mxu0 %v267
    %632 = vmatprep.subr.mxu0 0.0
    %633 = vmatpush1.msra.mxu0 %v266
    %634 = vmatprep.subr.mxu0 0.0
    %635 = vmatpush1.msra.mxu0 %v265
    %636 = vmatprep.subr.mxu0 0.0
    %637 = vmatpush1.msra.mxu0 %v264
    %638 = vmatprep.subr.mxu0 0.0
    %639 = vmatpush1.msra.mxu0 %v263
    %640 = vmatprep.subr.mxu0 0.0
    %641 = vmatpush1.msra.mxu0 %v262
    %642 = vmatprep.subr.mxu0 0.0
    %643 = vmatpush1.msra.mxu0 %v261
    %644 = vmatprep.subr.mxu0 0.0
    %645 = vmatpush1.msra.mxu0 %v260
    %646 = vmatprep.subr.mxu0 0.0
    %647 = vmatpush1.msra.mxu0 %v259
    %648 = vmatprep.subr.mxu0 0.0
    %649 = vmatpush1.msra.mxu0 %v258
    %650 = vmatprep.subr.mxu0 0.0
    %651 = vmatpush1.msra.mxu0 %v257
    %652 = vmatprep.subr.mxu0 0.0
    %653 = vmatpush1.msra.mxu0 %v256
    %654 = vmatprep.subr.mxu0 0.0
    %655 = vmatpush1.msra.mxu0 %v255
    %656 = vmatprep.subr.mxu0 0.0
    %657 = vmatpush1.msra.mxu0 %v254
    %658 = vmatprep.subr.mxu0 0.0
    %659 = vmatpush2.msra.mxu0 0.0
    %660 = vmatprep.subr.mxu0 0.0
    %661 = vmatpush2.msra.mxu0 0.0
    %662 = vmatprep.subr.mxu0 0.0
    %663 = vmatpush2.msra.mxu0 0.0
    %664 = vmatprep.subr.mxu0 0.0
    %665 = vmatpush2.msra.mxu0 0.0
    %666 = vmatprep.subr.mxu0 0.0
    %667 = vmatpush2.msra.mxu0 0.0
    %668 = vmatprep.subr.mxu0 0.0
    %669 = vmatpush2.msra.mxu0 0.0
    %670 = vmatprep.subr.mxu0 0.0
    %671 = vmatpush2.msra.mxu0 0.0
    %672 = vmatprep.subr.mxu0 0.0
    %673 = vmatpush2.msra.mxu0 0.0
    %674 = vmatprep.subr.mxu0 0.0
    %675 = vmatpush2.msra.mxu0 0.0
    %676 = vmatprep.subr.mxu0 0.0
    %677 = vmatpush2.msra.mxu0 0.0
    %678 = vmatprep.subr.mxu0 0.0
    %679 = vmatpush2.msra.mxu0 0.0
    %680 = vmatprep.subr.mxu0 0.0
    %681 = vmatpush2.msra.mxu0 0.0
    %682 = vmatprep.subr.mxu0 0.0
    %683 = vmatpush2.msra.mxu0 0.0
    %684 = vmatprep.subr.mxu0 0.0
    %685 = vmatpush2.msra.mxu0 0.0
    %686 = vmatprep.subr.mxu0 0.0
    %687 = vmatpush2.msra.mxu0 0.0
    %688 = vmatprep.subr.mxu0 0.0
    %689 = vmatpush2.msra.mxu0 0.0
    %690 = vmatprep.mubr.f32.mxu0 0.0
    %691 = vmatmul.mubr.f32.gmra.mxu0 %v625
    %v692 = vpop.f32.mrf.mxu0
    %v693 = vadd.f32 0.0, %v692
    %v694 = vpop.f32.mrf.mxu0
    %695 = vdwg.mxu0
    %v696 = vadd.f32 %v238, %v693
    %697 = vmatprep.subr.mxu0 0.0
    %698 = vmatpush1.msra.mxu0 %v269
    %699 = vmatprep.subr.mxu0 0.0
    %700 = vmatpush1.msra.mxu0 %v268
    %701 = vmatprep.subr.mxu0 0.0
    %702 = vmatpush1.msra.mxu0 %v267
    %703 = vmatprep.subr.mxu0 0.0
    %704 = vmatpush1.msra.mxu0 %v266
    %705 = vmatprep.subr.mxu0 0.0
    %706 = vmatpush1.msra.mxu0 %v265
    %707 = vmatprep.subr.mxu0 0.0
    %708 = vmatpush1.msra.mxu0 %v264
    %709 = vmatprep.subr.mxu0 0.0
    %710 = vmatpush1.msra.mxu0 %v263
    %711 = vmatprep.subr.mxu0 0.0
    %712 = vmatpush1.msra.mxu0 %v262
    %713 = vmatprep.subr.mxu0 0.0
    %714 = vmatpush1.msra.mxu0 %v261
    %715 = vmatprep.subr.mxu0 0.0
    %716 = vmatpush1.msra.mxu0 %v260
    %717 = vmatprep.subr.mxu0 0.0
    %718 = vmatpush1.msra.mxu0 %v259
    %719 = vmatprep.subr.mxu0 0.0
    %720 = vmatpush1.msra.mxu0 %v258
    %721 = vmatprep.subr.mxu0 0.0
    %722 = vmatpush1.msra.mxu0 %v257
    %723 = vmatprep.subr.mxu0 0.0
    %724 = vmatpush1.msra.mxu0 %v256
    %725 = vmatprep.subr.mxu0 0.0
    %726 = vmatpush1.msra.mxu0 %v255
    %727 = vmatprep.subr.mxu0 0.0
    %728 = vmatpush1.msra.mxu0 %v254
    %729 = vmatprep.subr.mxu0 0.0
    %730 = vmatpush2.msra.mxu0 0.0
    %731 = vmatprep.subr.mxu0 0.0
    %732 = vmatpush2.msra.mxu0 0.0
    %733 = vmatprep.subr.mxu0 0.0
    %734 = vmatpush2.msra.mxu0 0.0
    %735 = vmatprep.subr.mxu0 0.0
    %736 = vmatpush2.msra.mxu0 0.0
    %737 = vmatprep.subr.mxu0 0.0
    %738 = vmatpush2.msra.mxu0 0.0
    %739 = vmatprep.subr.mxu0 0.0
    %740 = vmatpush2.msra.mxu0 0.0
    %741 = vmatprep.subr.mxu0 0.0
    %742 = vmatpush2.msra.mxu0 0.0
    %743 = vmatprep.subr.mxu0 0.0
    %744 = vmatpush2.msra.mxu0 0.0
    %745 = vmatprep.subr.mxu0 0.0
    %746 = vmatpush2.msra.mxu0 0.0
    %747 = vmatprep.subr.mxu0 0.0
    %748 = vmatpush2.msra.mxu0 0.0
    %749 = vmatprep.subr.mxu0 0.0
    %750 = vmatpush2.msra.mxu0 0.0
    %751 = vmatprep.subr.mxu0 0.0
    %752 = vmatpush2.msra.mxu0 0.0
    %753 = vmatprep.subr.mxu0 0.0
    %754 = vmatpush2.msra.mxu0 0.0
    %755 = vmatprep.subr.mxu0 0.0
    %756 = vmatpush2.msra.mxu0 0.0
    %757 = vmatprep.subr.mxu0 0.0
    %758 = vmatpush2.msra.mxu0 0.0
    %759 = vmatprep.subr.mxu0 0.0
    %760 = vmatpush2.msra.mxu0 0.0
    %761 = vmatprep.mubr.f32.mxu0 0.0
    %762 = vmatmul.mubr.f32.gmra.mxu0 %v696
    %v763 = vpop.f32.mrf.mxu0
    %v764 = vadd.f32 0.0, %v763
    %v765 = vpop.f32.mrf.mxu0
    %766 = vdwg.mxu0
    %v767 = vadd.f32 %v244, %v764
    %768 = vmatprep.subr.mxu0 0.0
    %769 = vmatpush1.msra.mxu0 %v269
    %770 = vmatprep.subr.mxu0 0.0
    %771 = vmatpush1.msra.mxu0 %v268
    %772 = vmatprep.subr.mxu0 0.0
    %773 = vmatpush1.msra.mxu0 %v267
    %774 = vmatprep.subr.mxu0 0.0
    %775 = vmatpush1.msra.mxu0 %v266
    %776 = vmatprep.subr.mxu0 0.0
    %777 = vmatpush1.msra.mxu0 %v265
    %778 = vmatprep.subr.mxu0 0.0
    %779 = vmatpush1.msra.mxu0 %v264
    %780 = vmatprep.subr.mxu0 0.0
    %781 = vmatpush1.msra.mxu0 %v263
    %782 = vmatprep.subr.mxu0 0.0
    %783 = vmatpush1.msra.mxu0 %v262
    %784 = vmatprep.subr.mxu0 0.0
    %785 = vmatpush1.msra.mxu0 %v261
    %786 = vmatprep.subr.mxu0 0.0
    %787 = vmatpush1.msra.mxu0 %v260
    %788 = vmatprep.subr.mxu0 0.0
    %789 = vmatpush1.msra.mxu0 %v259
    %790 = vmatprep.subr.mxu0 0.0
    %791 = vmatpush1.msra.mxu0 %v258
    %792 = vmatprep.subr.mxu0 0.0
    %793 = vmatpush1.msra.mxu0 %v257
    %794 = vmatprep.subr.mxu0 0.0
    %795 = vmatpush1.msra.mxu0 %v256
    %796 = vmatprep.subr.mxu0 0.0
    %797 = vmatpush1.msra.mxu0 %v255
    %798 = vmatprep.subr.mxu0 0.0
    %799 = vmatpush1.msra.mxu0 %v254
    %800 = vmatprep.subr.mxu0 0.0
    %801 = vmatpush2.msra.mxu0 0.0
    %802 = vmatprep.subr.mxu0 0.0
    %803 = vmatpush2.msra.mxu0 0.0
    %804 = vmatprep.subr.mxu0 0.0
    %805 = vmatpush2.msra.mxu0 0.0
    %806 = vmatprep.subr.mxu0 0.0
    %807 = vmatpush2.msra.mxu0 0.0
    %808 = vmatprep.subr.mxu0 0.0
    %809 = vmatpush2.msra.mxu0 0.0
    %810 = vmatprep.subr.mxu0 0.0
    %811 = vmatpush2.msra.mxu0 0.0
    %812 = vmatprep.subr.mxu0 0.0
    %813 = vmatpush2.msra.mxu0 0.0
    %814 = vmatprep.subr.mxu0 0.0
    %815 = vmatpush2.msra.mxu0 0.0
    %816 = vmatprep.subr.mxu0 0.0
    %817 = vmatpush2.msra.mxu0 0.0
    %818 = vmatprep.subr.mxu0 0.0
    %819 = vmatpush2.msra.mxu0 0.0
    %820 = vmatprep.subr.mxu0 0.0
    %821 = vmatpush2.msra.mxu0 0.0
    %822 = vmatprep.subr.mxu0 0.0
    %823 = vmatpush2.msra.mxu0 0.0
    %824 = vmatprep.subr.mxu0 0.0
    %825 = vmatpush2.msra.mxu0 0.0
    %826 = vmatprep.subr.mxu0 0.0
    %827 = vmatpush2.msra.mxu0 0.0
    %828 = vmatprep.subr.mxu0 0.0
    %829 = vmatpush2.msra.mxu0 0.0
    %830 = vmatprep.subr.mxu0 0.0
    %831 = vmatpush2.msra.mxu0 0.0
    %832 = vmatprep.mubr.f32.mxu0 0.0
    %833 = vmatmul.mubr.f32.gmra.mxu0 %v767
    %v834 = vpop.f32.mrf.mxu0
    %v835 = vadd.f32 0.0, %v834
    %v836 = vpop.f32.mrf.mxu0
    %837 = vdwg.mxu0
    %v838 = vadd.f32 %v250, %v835
    %839 = vst [vmem:[%s10] sm:$0xff] %v838
    %v840 = vld [vmem:[#allocation4] sm:$0xff]
    %v841 = vld [vmem:[#allocation4 + $0x8] sm:$0xff]
    %v842 = vld [vmem:[#allocation4 + $0x10] sm:$0xff]
    %v843 = vld [vmem:[#allocation4 + $0x18] sm:$0xff]
    %v844 = vld [vmem:[#allocation4 + $0x20] sm:$0xff]
    %v845 = vld [vmem:[#allocation4 + $0x28] sm:$0xff]
    %v846 = vld [vmem:[#allocation4 + $0x30] sm:$0xff]
    %v847 = vld [vmem:[#allocation4 + $0x38] sm:$0xff]
    %v848 = vld [vmem:[#allocation4 + $0x40] sm:$0xff]
    %v849 = vld [vmem:[#allocation4 + $0x48] sm:$0xff]
    %v850 = vld [vmem:[#allocation4 + $0x50] sm:$0xff]
    %v851 = vld [vmem:[#allocation4 + $0x58] sm:$0xff]
    %v852 = vld [vmem:[#allocation4 + $0x60] sm:$0xff]
    %v853 = vld [vmem:[#allocation4 + $0x68] sm:$0xff]
    %v854 = vld [vmem:[#allocation4 + $0x70] sm:$0xff]
    %v855 = vld [vmem:[#allocation4 + $0x78] sm:$0xff]
    %856 = vmatprep.subr.mxu0 0.0
    %857 = vmatpush1.msra.mxu0 %v855
    %858 = vmatprep.subr.mxu0 0.0
    %859 = vmatpush1.msra.mxu0 %v854
    %860 = vmatprep.subr.mxu0 0.0
    %861 = vmatpush1.msra.mxu0 %v853
    %862 = vmatprep.subr.mxu0 0.0
    %863 = vmatpush1.msra.mxu0 %v852
    %864 = vmatprep.subr.mxu0 0.0
    %865 = vmatpush1.msra.mxu0 %v851
    %866 = vmatprep.subr.mxu0 0.0
    %867 = vmatpush1.msra.mxu0 %v850
    %868 = vmatprep.subr.mxu0 0.0
    %869 = vmatpush1.msra.mxu0 %v849
    %870 = vmatprep.subr.mxu0 0.0
    %871 = vmatpush1.msra.mxu0 %v848
    %872 = vmatprep.subr.mxu0 0.0
    %873 = vmatpush1.msra.mxu0 %v847
    %874 = vmatprep.subr.mxu0 0.0
    %875 = vmatpush1.msra.mxu0 %v846
    %876 = vmatprep.subr.mxu0 0.0
    %877 = vmatpush1.msra.mxu0 %v845
    %878 = vmatprep.subr.mxu0 0.0
    %879 = vmatpush1.msra.mxu0 %v844
    %880 = vmatprep.subr.mxu0 0.0
    %881 = vmatpush1.msra.mxu0 %v843
    %882 = vmatprep.subr.mxu0 0.0
    %883 = vmatpush1.msra.mxu0 %v842
    %884 = vmatprep.subr.mxu0 0.0
    %885 = vmatpush1.msra.mxu0 %v841
    %886 = vmatprep.subr.mxu0 0.0
    %887 = vmatpush1.msra.mxu0 %v840
    %888 = vmatprep.subr.mxu0 0.0
    %889 = vmatpush2.msra.mxu0 0.0
    %890 = vmatprep.subr.mxu0 0.0
    %891 = vmatpush2.msra.mxu0 0.0
    %892 = vmatprep.subr.mxu0 0.0
    %893 = vmatpush2.msra.mxu0 0.0
    %894 = vmatprep.subr.mxu0 0.0
    %895 = vmatpush2.msra.mxu0 0.0
    %896 = vmatprep.subr.mxu0 0.0
    %897 = vmatpush2.msra.mxu0 0.0
    %898 = vmatprep.subr.mxu0 0.0
    %899 = vmatpush2.msra.mxu0 0.0
    %900 = vmatprep.subr.mxu0 0.0
    %901 = vmatpush2.msra.mxu0 0.0
    %902 = vmatprep.subr.mxu0 0.0
    %903 = vmatpush2.msra.mxu0 0.0
    %904 = vmatprep.subr.mxu0 0.0
    %905 = vmatpush2.msra.mxu0 0.0
    %906 = vmatprep.subr.mxu0 0.0
    %907 = vmatpush2.msra.mxu0 0.0
    %908 = vmatprep.subr.mxu0 0.0
    %909 = vmatpush2.msra.mxu0 0.0
    %910 = vmatprep.subr.mxu0 0.0
    %911 = vmatpush2.msra.mxu0 0.0
    %912 = vmatprep.subr.mxu0 0.0
    %913 = vmatpush2.msra.mxu0 0.0
    %914 = vmatprep.subr.mxu0 0.0
    %915 = vmatpush2.msra.mxu0 0.0
    %916 = vmatprep.subr.mxu0 0.0
    %917 = vmatpush2.msra.mxu0 0.0
    %918 = vmatprep.subr.mxu0 0.0
    %919 = vmatpush2.msra.mxu0 0.0
    %920 = vmatprep.mubr.f32.mxu0 0.0
    %921 = vmatmul.mubr.f32.gmra.mxu0 %v270
    %v922 = vpop.f32.mrf.mxu0
    %v923 = vadd.f32 0.0, %v922
    %v924 = vpop.f32.mrf.mxu0
    %925 = vmatprep.mubr.f32.mxu0 0.0
    %926 = vmatmul.mubr.f32.gmra.mxu0 %v341
    %v927 = vpop.f32.mrf.mxu0
    %v928 = vadd.f32 0.0, %v927
    %v929 = vpop.f32.mrf.mxu0
    %930 = vmatprep.mubr.f32.mxu0 0.0
    %931 = vmatmul.mubr.f32.gmra.mxu0 %v412
    %v932 = vpop.f32.mrf.mxu0
    %v933 = vadd.f32 0.0, %v932
    %v934 = vpop.f32.mrf.mxu0
    %935 = vmatprep.mubr.f32.mxu0 0.0
    %936 = vmatmul.mubr.f32.gmra.mxu0 %v483
    %v937 = vpop.f32.mrf.mxu0
    %v938 = vadd.f32 0.0, %v937
    %v939 = vpop.f32.mrf.mxu0
    %940 = vmatprep.mubr.f32.mxu0 0.0
    %941 = vmatmul.mubr.f32.gmra.mxu0 %v554
    %v942 = vpop.f32.mrf.mxu0
    %v943 = vadd.f32 0.0, %v942
    %v944 = vpop.f32.mrf.mxu0
    %945 = vmatprep.mubr.f32.mxu0 0.0
    %946 = vmatmul.mubr.f32.gmra.mxu0 %v625
    %v947 = vpop.f32.mrf.mxu0
    %v948 = vadd.f32 0.0, %v947
    %v949 = vpop.f32.mrf.mxu0
    %950 = vmatprep.mubr.f32.mxu0 0.0
    %951 = vmatmul.mubr.f32.gmra.mxu0 %v696
    %v952 = vpop.f32.mrf.mxu0
    %v953 = vadd.f32 0.0, %v952
    %v954 = vpop.f32.mrf.mxu0
    %955 = vmatprep.mubr.f32.mxu0 0.0
    %956 = vmatmul.mubr.f32.gmra.mxu0 %v767
    %v957 = vpop.f32.mrf.mxu0
    %v958 = vadd.f32 0.0, %v957
    %v959 = vpop.f32.mrf.mxu0
    %960 = vdwg.mxu0
    %v961 = vadd.f32 %v210, %v923
    %v962 = vadd.f32 %v216, %v928
    %v963 = vadd.f32 %v222, %v933
    %v964 = vadd.f32 %v228, %v938
    %v965 = vadd.f32 %v234, %v943
    %v966 = vadd.f32 %v240, %v948
    %v967 = vadd.f32 %v246, %v953
    %v968 = vadd.f32 %v252, %v958
    %v969 = vld [vmem:[#allocation6] sm:$0xff]
    %v970 = vld [vmem:[#allocation6 + $0x8] sm:$0xff]
    %v971 = vld [vmem:[#allocation6 + $0x10] sm:$0xff]
    %v972 = vld [vmem:[#allocation6 + $0x18] sm:$0xff]
    %v973 = vld [vmem:[#allocation6 + $0x20] sm:$0xff]
    %v974 = vld [vmem:[#allocation6 + $0x28] sm:$0xff]
    %v975 = vld [vmem:[#allocation6 + $0x30] sm:$0xff]
    %v976 = vld [vmem:[#allocation6 + $0x38] sm:$0xff]
    %v977 = vld [vmem:[#allocation6 + $0x40] sm:$0xff]
    %v978 = vld [vmem:[#allocation6 + $0x48] sm:$0xff]
    %v979 = vld [vmem:[#allocation6 + $0x50] sm:$0xff]
    %v980 = vld [vmem:[#allocation6 + $0x58] sm:$0xff]
    %v981 = vld [vmem:[#allocation6 + $0x60] sm:$0xff]
    %v982 = vld [vmem:[#allocation6 + $0x68] sm:$0xff]
    %v983 = vld [vmem:[#allocation6 + $0x70] sm:$0xff]
    %v984 = vld [vmem:[#allocation6 + $0x78] sm:$0xff]
    %v985 = vld [vmem:[#allocation7] sm:$0xff]
    %v986 = vld [vmem:[#allocation7 + $0x8] sm:$0xff]
    %v987 = vld [vmem:[#allocation7 + $0x10] sm:$0xff]
    %v988 = vld [vmem:[#allocation7 + $0x18] sm:$0xff]
    %v989 = vld [vmem:[#allocation7 + $0x20] sm:$0xff]
    %v990 = vld [vmem:[#allocation7 + $0x28] sm:$0xff]
    %v991 = vld [vmem:[#allocation7 + $0x30] sm:$0xff]
    %v992 = vld [vmem:[#allocation7 + $0x38] sm:$0xff]
    %v993 = vld [vmem:[#allocation7 + $0x40] sm:$0xff]
    %v994 = vld [vmem:[#allocation7 + $0x48] sm:$0xff]
    %v995 = vld [vmem:[#allocation7 + $0x50] sm:$0xff]
    %v996 = vld [vmem:[#allocation7 + $0x58] sm:$0xff]
    %v997 = vld [vmem:[#allocation7 + $0x60] sm:$0xff]
    %v998 = vld [vmem:[#allocation7 + $0x68] sm:$0xff]
    %v999 = vld [vmem:[#allocation7 + $0x70] sm:$0xff]
    %v1000 = vld [vmem:[#allocation7 + $0x78] sm:$0xff]
    %1001 = vmatprep.subr.mxu0 0.0
    %1002 = vmatpush1.msra.mxu0 %v1000
    %1003 = vmatprep.subr.mxu0 0.0
    %1004 = vmatpush1.msra.mxu0 %v999
    %1005 = vmatprep.subr.mxu0 0.0
    %1006 = vmatpush1.msra.mxu0 %v998
    %1007 = vmatprep.subr.mxu0 0.0
    %1008 = vmatpush1.msra.mxu0 %v997
    %1009 = vmatprep.subr.mxu0 0.0
    %1010 = vmatpush1.msra.mxu0 %v996
    %1011 = vmatprep.subr.mxu0 0.0
    %1012 = vmatpush1.msra.mxu0 %v995
    %1013 = vmatprep.subr.mxu0 0.0
    %1014 = vmatpush1.msra.mxu0 %v994
    %1015 = vmatprep.subr.mxu0 0.0
    %1016 = vmatpush1.msra.mxu0 %v993
    %1017 = vmatprep.subr.mxu0 0.0
    %1018 = vmatpush1.msra.mxu0 %v992
    %1019 = vmatprep.subr.mxu0 0.0
    %1020 = vmatpush1.msra.mxu0 %v991
    %1021 = vmatprep.subr.mxu0 0.0
    %1022 = vmatpush1.msra.mxu0 %v990
    %1023 = vmatprep.subr.mxu0 0.0
    %1024 = vmatpush1.msra.mxu0 %v989
    %1025 = vmatprep.subr.mxu0 0.0
    %1026 = vmatpush1.msra.mxu0 %v988
    %1027 = vmatprep.subr.mxu0 0.0
    %1028 = vmatpush1.msra.mxu0 %v987
    %1029 = vmatprep.subr.mxu0 0.0
    %1030 = vmatpush1.msra.mxu0 %v986
    %1031 = vmatprep.subr.mxu0 0.0
    %1032 = vmatpush1.msra.mxu0 %v985
    %1033 = vmatprep.subr.mxu0 0.0
    %1034 = vmatpush2.msra.mxu0 0.0
    %1035 = vmatprep.subr.mxu0 0.0
    %1036 = vmatpush2.msra.mxu0 0.0
    %1037 = vmatprep.subr.mxu0 0.0
    %1038 = vmatpush2.msra.mxu0 0.0
    %1039 = vmatprep.subr.mxu0 0.0
    %1040 = vmatpush2.msra.mxu0 0.0
    %1041 = vmatprep.subr.mxu0 0.0
    %1042 = vmatpush2.msra.mxu0 0.0
    %1043 = vmatprep.subr.mxu0 0.0
    %1044 = vmatpush2.msra.mxu0 0.0
    %1045 = vmatprep.subr.mxu0 0.0
    %1046 = vmatpush2.msra.mxu0 0.0
    %1047 = vmatprep.subr.mxu0 0.0
    %1048 = vmatpush2.msra.mxu0 0.0
    %1049 = vmatprep.subr.mxu0 0.0
    %1050 = vmatpush2.msra.mxu0 0.0
    %1051 = vmatprep.subr.mxu0 0.0
    %1052 = vmatpush2.msra.mxu0 0.0
    %1053 = vmatprep.subr.mxu0 0.0
    %1054 = vmatpush2.msra.mxu0 0.0
    %1055 = vmatprep.subr.mxu0 0.0
    %1056 = vmatpush2.msra.mxu0 0.0
    %1057 = vmatprep.subr.mxu0 0.0
    %1058 = vmatpush2.msra.mxu0 0.0
    %1059 = vmatprep.subr.mxu0 0.0
    %1060 = vmatpush2.msra.mxu0 0.0
    %1061 = vmatprep.subr.mxu0 0.0
    %1062 = vmatpush2.msra.mxu0 0.0
    %1063 = vmatprep.subr.mxu0 0.0
    %1064 = vmatpush2.msra.mxu0 0.0
    %1065 = vmatprep.mubr.f32.mxu0 0.0
    %1066 = vmatmul.mubr.f32.gmra.mxu0 %v961
    %v1067 = vpop.f32.mrf.mxu0
    %v1068 = vadd.f32 0.0, %v1067
    %v1069 = vpop.f32.mrf.mxu0
    %1070 = vmatprep.mubr.f32.mxu0 0.0
    %1071 = vmatmul.mubr.f32.gmra.mxu0 %v962
    %v1072 = vpop.f32.mrf.mxu0
    %v1073 = vadd.f32 0.0, %v1072
    %v1074 = vpop.f32.mrf.mxu0
    %1075 = vmatprep.mubr.f32.mxu0 0.0
    %1076 = vmatmul.mubr.f32.gmra.mxu0 %v963
    %v1077 = vpop.f32.mrf.mxu0
    %v1078 = vadd.f32 0.0, %v1077
    %v1079 = vpop.f32.mrf.mxu0
    %1080 = vmatprep.mubr.f32.mxu0 0.0
    %1081 = vmatmul.mubr.f32.gmra.mxu0 %v964
    %v1082 = vpop.f32.mrf.mxu0
    %v1083 = vadd.f32 0.0, %v1082
    %v1084 = vpop.f32.mrf.mxu0
    %1085 = vmatprep.mubr.f32.mxu0 0.0
    %1086 = vmatmul.mubr.f32.gmra.mxu0 %v965
    %v1087 = vpop.f32.mrf.mxu0
    %v1088 = vadd.f32 0.0, %v1087
    %v1089 = vpop.f32.mrf.mxu0
    %1090 = vmatprep.mubr.f32.mxu0 0.0
    %1091 = vmatmul.mubr.f32.gmra.mxu0 %v966
    %v1092 = vpop.f32.mrf.mxu0
    %v1093 = vadd.f32 0.0, %v1092
    %v1094 = vpop.f32.mrf.mxu0
    %1095 = vmatprep.mubr.f32.mxu0 0.0
    %1096 = vmatmul.mubr.f32.gmra.mxu0 %v967
    %v1097 = vpop.f32.mrf.mxu0
    %v1098 = vadd.f32 0.0, %v1097
    %v1099 = vpop.f32.mrf.mxu0
    %1100 = vmatprep.mubr.f32.mxu0 0.0
    %1101 = vmatmul.mubr.f32.gmra.mxu0 %v968
    %v1102 = vpop.f32.mrf.mxu0
    %v1103 = vadd.f32 0.0, %v1102
    %v1104 = vpop.f32.mrf.mxu0
    %1105 = vdwg.mxu0
    %1106 = vmatprep.subr.mxu0 0.0
    %1107 = vmatpush1.msra.mxu0 %v984
    %1108 = vmatprep.subr.mxu0 0.0
    %1109 = vmatpush1.msra.mxu0 %v983
    %1110 = vmatprep.subr.mxu0 0.0
    %1111 = vmatpush1.msra.mxu0 %v982
    %1112 = vmatprep.subr.mxu0 0.0
    %1113 = vmatpush1.msra.mxu0 %v981
    %1114 = vmatprep.subr.mxu0 0.0
    %1115 = vmatpush1.msra.mxu0 %v980
    %1116 = vmatprep.subr.mxu0 0.0
    %1117 = vmatpush1.msra.mxu0 %v979
    %1118 = vmatprep.subr.mxu0 0.0
    %1119 = vmatpush1.msra.mxu0 %v978
    %1120 = vmatprep.subr.mxu0 0.0
    %1121 = vmatpush1.msra.mxu0 %v977
    %1122 = vmatprep.subr.mxu0 0.0
    %1123 = vmatpush1.msra.mxu0 %v976
    %1124 = vmatprep.subr.mxu0 0.0
    %1125 = vmatpush1.msra.mxu0 %v975
    %1126 = vmatprep.subr.mxu0 0.0
    %1127 = vmatpush1.msra.mxu0 %v974
    %1128 = vmatprep.subr.mxu0 0.0
    %1129 = vmatpush1.msra.mxu0 %v973
    %1130 = vmatprep.subr.mxu0 0.0
    %1131 = vmatpush1.msra.mxu0 %v972
    %1132 = vmatprep.subr.mxu0 0.0
    %1133 = vmatpush1.msra.mxu0 %v971
    %1134 = vmatprep.subr.mxu0 0.0
    %1135 = vmatpush1.msra.mxu0 %v970
    %1136 = vmatprep.subr.mxu0 0.0
    %1137 = vmatpush1.msra.mxu0 %v969
    %1138 = vmatprep.subr.mxu0 0.0
    %1139 = vmatpush2.msra.mxu0 0.0
    %1140 = vmatprep.subr.mxu0 0.0
    %1141 = vmatpush2.msra.mxu0 0.0
    %1142 = vmatprep.subr.mxu0 0.0
    %1143 = vmatpush2.msra.mxu0 0.0
    %1144 = vmatprep.subr.mxu0 0.0
    %1145 = vmatpush2.msra.mxu0 0.0
    %1146 = vmatprep.subr.mxu0 0.0
    %1147 = vmatpush2.msra.mxu0 0.0
    %1148 = vmatprep.subr.mxu0 0.0
    %1149 = vmatpush2.msra.mxu0 0.0
    %1150 = vmatprep.subr.mxu0 0.0
    %1151 = vmatpush2.msra.mxu0 0.0
    %1152 = vmatprep.subr.mxu0 0.0
    %1153 = vmatpush2.msra.mxu0 0.0
    %1154 = vmatprep.subr.mxu0 0.0
    %1155 = vmatpush2.msra.mxu0 0.0
    %1156 = vmatprep.subr.mxu0 0.0
    %1157 = vmatpush2.msra.mxu0 0.0
    %1158 = vmatprep.subr.mxu0 0.0
    %1159 = vmatpush2.msra.mxu0 0.0
    %1160 = vmatprep.subr.mxu0 0.0
    %1161 = vmatpush2.msra.mxu0 0.0
    %1162 = vmatprep.subr.mxu0 0.0
    %1163 = vmatpush2.msra.mxu0 0.0
    %1164 = vmatprep.subr.mxu0 0.0
    %1165 = vmatpush2.msra.mxu0 0.0
    %1166 = vmatprep.subr.mxu0 0.0
    %1167 = vmatpush2.msra.mxu0 0.0
    %1168 = vmatprep.subr.mxu0 0.0
    %1169 = vmatpush2.msra.mxu0 0.0
    %1170 = vmatprep.mubr.f32.mxu0 0.0
    %1171 = vmatmul.mubr.f32.gmra.mxu0 %v341
    %v1172 = vpop.f32.mrf.mxu0
    %v1173 = vadd.f32 %v1068, %v1172
    %v1174 = vpop.f32.mrf.mxu0
    %1175 = vmatprep.mubr.f32.mxu0 0.0
    %1176 = vmatmul.mubr.f32.gmra.mxu0 %v412
    %v1177 = vpop.f32.mrf.mxu0
    %v1178 = vadd.f32 %v1073, %v1177
    %v1179 = vpop.f32.mrf.mxu0
    %1180 = vmatprep.mubr.f32.mxu0 0.0
    %1181 = vmatmul.mubr.f32.gmra.mxu0 %v483
    %v1182 = vpop.f32.mrf.mxu0
    %v1183 = vadd.f32 %v1078, %v1182
    %v1184 = vpop.f32.mrf.mxu0
    %1185 = vmatprep.mubr.f32.mxu0 0.0
    %1186 = vmatmul.mubr.f32.gmra.mxu0 %v554
    %v1187 = vpop.f32.mrf.mxu0
    %v1188 = vadd.f32 %v1083, %v1187
    %v1189 = vpop.f32.mrf.mxu0
    %1190 = vmatprep.mubr.f32.mxu0 0.0
    %1191 = vmatmul.mubr.f32.gmra.mxu0 %v625
    %v1192 = vpop.f32.mrf.mxu0
    %v1193 = vadd.f32 %v1088, %v1192
    %v1194 = vpop.f32.mrf.mxu0
    %1195 = vmatprep.mubr.f32.mxu0 0.0
    %1196 = vmatmul.mubr.f32.gmra.mxu0 %v696
    %v1197 = vpop.f32.mrf.mxu0
    %v1198 = vadd.f32 %v1093, %v1197
    %v1199 = vpop.f32.mrf.mxu0
    %1200 = vmatprep.mubr.f32.mxu0 0.0
    %1201 = vmatmul.mubr.f32.gmra.mxu0 %v767
    %v1202 = vpop.f32.mrf.mxu0
    %v1203 = vadd.f32 %v1098, %v1202
    %v1204 = vpop.f32.mrf.mxu0
    %1205 = vmatprep.mubr.f32.mxu0 0.0
    %1206 = vmatmul.mubr.f32.gmra.mxu0 %v838
    %v1207 = vpop.f32.mrf.mxu0
    %v1208 = vadd.f32 %v1103, %v1207
    %v1209 = vpop.f32.mrf.mxu0
    %1210 = vdwg.mxu0
    %v1211 = vld [vmem:[%s8] sm:$0x1]
    %v1213 = vlaneseq
    %v1214 = vshrl.u32 %v1213, 7
    %v1215 = vsub.s32 0, %v1214
    %v1216 = vrot.slane %v1211, %v1215
    %v1218 = vadd.f32 %v1173, %v1216
    %v1219 = vadd.f32 %v1178, %v1216
    %v1220 = vadd.f32 %v1183, %v1216
    %v1221 = vadd.f32 %v1188, %v1216
    %v1222 = vadd.f32 %v1193, %v1216
    %v1223 = vadd.f32 %v1198, %v1216
    %v1224 = vadd.f32 %v1203, %v1216
    %v1225 = vadd.f32 %v1208, %v1216
    %1226 = vmax.xlane.f32.xlu0 %v1218
    %v1227 = vpop.xlane.xlu0 %1226
    %1228 = vmax.xlane.f32.xlu0 %v1219
    %v1229 = vpop.xlane.xlu0 %1228
    %1230 = vmax.xlane.f32.xlu0 %v1220
    %v1231 = vpop.xlane.xlu0 %1230
    %1232 = vmax.xlane.f32.xlu0 %v1221
    %v1233 = vpop.xlane.xlu0 %1232
    %1234 = vmax.xlane.f32.xlu0 %v1222
    %v1235 = vpop.xlane.xlu0 %1234
    %1236 = vmax.xlane.f32.xlu0 %v1223
    %v1237 = vpop.xlane.xlu0 %1236
    %1238 = vmax.xlane.f32.xlu0 %v1224
    %v1239 = vpop.xlane.xlu0 %1238
    %1240 = vmax.xlane.f32.xlu0 %v1225
    %v1241 = vpop.xlane.xlu0 %1240
    %v1242 = vsub.f32 %v1218, %v1227
    %v1243 = vsub.f32 %v1219, %v1229
    %v1244 = vsub.f32 %v1220, %v1231
    %v1245 = vsub.f32 %v1221, %v1233
    %v1246 = vsub.f32 %v1222, %v1235
    %v1247 = vsub.f32 %v1223, %v1237
    %v1248 = vsub.f32 %v1224, %v1239
    %v1249 = vsub.f32 %v1225, %v1241
    %v1250 = vmul.f32 %v1242, 1.442695
    %v1251 = vpow.pop %v1250
    %v1252 = vmul.f32 %v1243, 1.442695
    %v1253 = vpow.pop %v1252
    %v1254 = vmul.f32 %v1244, 1.442695
    %v1255 = vpow.pop %v1254
    %v1256 = vmul.f32 %v1245, 1.442695
    %v1257 = vpow.pop %v1256
    %v1258 = vmul.f32 %v1246, 1.442695
    %v1259 = vpow.pop %v1258
    %v1260 = vmul.f32 %v1247, 1.442695
    %v1261 = vpow.pop %v1260
    %v1262 = vmul.f32 %v1248, 1.442695
    %v1263 = vpow.pop %v1262
    %v1264 = vmul.f32 %v1249, 1.442695
    %v1265 = vpow.pop %v1264
    %1266 = vadd.xlane.f32.xlu0 %v1251
    %v1267 = vpop.xlane.xlu0 %1266
    %1268 = vadd.xlane.f32.xlu0 %v1253
    %v1269 = vpop.xlane.xlu0 %1268
    %1270 = vadd.xlane.f32.xlu0 %v1255
    %v1271 = vpop.xlane.xlu0 %1270
    %1272 = vadd.xlane.f32.xlu0 %v1257
    %v1273 = vpop.xlane.xlu0 %1272
    %1274 = vadd.xlane.f32.xlu0 %v1259
    %v1275 = vpop.xlane.xlu0 %1274
    %1276 = vadd.xlane.f32.xlu0 %v1261
    %v1277 = vpop.xlane.xlu0 %1276
    %1278 = vadd.xlane.f32.xlu0 %v1263
    %v1279 = vpop.xlane.xlu0 %1278
    %1280 = vadd.xlane.f32.xlu0 %v1265
    %v1281 = vpop.xlane.xlu0 %1280
    %v1282 = vlog2.pop %v1267
    %v1283 = vmul.f32 %v1282, 0.6931472
    %v1284 = vlog2.pop %v1269
    %v1285 = vmul.f32 %v1284, 0.6931472
    %v1286 = vlog2.pop %v1271
    %v1287 = vmul.f32 %v1286, 0.6931472
    %v1288 = vlog2.pop %v1273
    %v1289 = vmul.f32 %v1288, 0.6931472
    %v1290 = vlog2.pop %v1275
    %v1291 = vmul.f32 %v1290, 0.6931472
    %v1292 = vlog2.pop %v1277
    %v1293 = vmul.f32 %v1292, 0.6931472
    %v1294 = vlog2.pop %v1279
    %v1295 = vmul.f32 %v1294, 0.6931472
    %v1296 = vlog2.pop %v1281
    %v1297 = vmul.f32 %v1296, 0.6931472
    %v1298 = vsub.f32 %v1242, %v1283
    %v1299 = vsub.f32 %v1243, %v1285
    %v1300 = vsub.f32 %v1244, %v1287
    %v1301 = vsub.f32 %v1245, %v1289
    %v1302 = vsub.f32 %v1246, %v1291
    %v1303 = vsub.f32 %v1247, %v1293
    %v1304 = vsub.f32 %v1248, %v1295
    %v1305 = vsub.f32 %v1249, %v1297
    %1306 = vst [vmem:[%s9] sm:$0xff] %v1298
    %1307 = vst [vmem:[%s9 + $0x8] sm:$0xff] %v1299
    %1308 = vst [vmem:[%s9 + $0x10] sm:$0xff] %v1300
    %1309 = vst [vmem:[%s9 + $0x18] sm:$0xff] %v1301
    %1310 = vst [vmem:[%s9 + $0x20] sm:$0xff] %v1302
    %1311 = vst [vmem:[%s9 + $0x28] sm:$0xff] %v1303
    %1312 = vst [vmem:[%s9 + $0x30] sm:$0xff] %v1304
    %1313 = vst [vmem:[%s9 + $0x38] sm:$0xff] %v1305
    // Predicated region
    $region54: #{rnn_forward_seq.1} parent=1 // pred_check
      _
    $region55: #{rnn_forward_seq.1} parent=1 // pred_check_branch
      %1315 = sbr.rel (0) target = $region57
    $region56: #{rnn_forward_seq.1} parent=1 // pred_region
      _
    $region57: #{rnn_forward_seq.1} parent=1 // pred_fallthru
      _
    // Predicated region
    $region58: #{rnn_forward_seq.1} parent=1 // pred_check
      _
    $region59: #{rnn_forward_seq.1} parent=1 // pred_check_branch
      %1317 = sbr.rel (0) target = $region61
    $region60: #{rnn_forward_seq.1} parent=1 // pred_region
      _
    $region61: #{rnn_forward_seq.1} parent=1 // pred_fallthru
      _
    // Predicated region
    $region62: #{rnn_forward_seq.1} parent=1 // pred_check
      _
    $region63: #{rnn_forward_seq.1} parent=1 // pred_check_branch
      %1319 = sbr.rel (0) target = $region65
    $region64: #{rnn_forward_seq.1} parent=1 // pred_region
      _
    $region65: #{rnn_forward_seq.1} parent=1 // pred_fallthru
      _
    // Predicated region
    $region66: #{rnn_forward_seq.1} parent=1 // pred_check
      _
    $region67: #{rnn_forward_seq.1} parent=1 // pred_check_branch
      %1321 = sbr.rel (0) target = $region69
    $region68: #{rnn_forward_seq.1} parent=1 // pred_region
      _
    $region69: #{rnn_forward_seq.1} parent=1 // pred_fallthru
      _
    %1322 = vsyncpa [#allocation3], 1
    %1323 = vsyncpa [#allocation5], 1
    %1324 = vsyncpa [#allocation8], 1

</llo_original>
